<compile_context>
chip_gen: v7x
topology: tpu7x:2x2x1
jax: 0.10.0
libtpu: 0.0.40
codegen_flags: <defaults>
</compile_context>

<pallas_src>
import functools

import jax
import jax.numpy as jnp
from jax import lax
from jax.experimental import pallas as pl
from jax.experimental.pallas import tpu as pltpu


def _round_up(x, m):
    return ((x + m - 1) // m) * m


# ---------------------------------------------------------------------------
# Kernel 1: fused bilinear affine warp for both images + preprocess (2x - 1).
# ---------------------------------------------------------------------------
def _warp_kernel(minv_ref, xo_ref, yo_ref, img_ref, out_ref, *, H, W):
    """One (batch, dd-tile) grid step.

    minv_ref: (B, 6)  SMEM scalar prefetch, dst->src affine per batch element.
    xo_ref/yo_ref: (1, TILE_DD) f32 destination pixel coords (precomputed).
    img_ref : (1, 2C, H*W) bf16, imageA & imageB stacked on the channel axis.
    out_ref : (1, 2C, TILE_DD) bf16 warped + preprocessed output.
    """
    b = pl.program_id(0)
    a11 = minv_ref[b, 0]
    a12 = minv_ref[b, 1]
    a13 = minv_ref[b, 2]
    a21 = minv_ref[b, 3]
    a22 = minv_ref[b, 4]
    a23 = minv_ref[b, 5]

    xo = xo_ref[...]                        # (1, TILE_DD) f32
    yo = yo_ref[...]

    xs = a11 * xo + a12 * yo + a13          # source x coords
    ys = a21 * xo + a22 * yo + a23          # source y coords

    x0 = jnp.floor(xs)
    y0 = jnp.floor(ys)
    tx = xs - x0
    ty = ys - y0

    hw = H * W
    tile = xo.shape[-1]
    src_row = lax.broadcasted_iota(jnp.int32, (hw, tile), 0)

    def corner(xc, yc, w):
        valid = ((xc >= 0.0) & (xc <= W - 1.0) &
                 (yc >= 0.0) & (yc <= H - 1.0))
        w_eff = jnp.where(valid, w, 0.0)                      # (1, tile)
        xi = jnp.clip(xc, 0.0, W - 1.0).astype(jnp.int32)
        yi = jnp.clip(yc, 0.0, H - 1.0).astype(jnp.int32)
        fidx = yi * W + xi                                    # (1, tile)
        # One-hot sampling-matrix contribution (no gather needed).
        return jnp.where(src_row == fidx, w_eff, 0.0)         # (hw, tile)

    # TODO(synk): for very large H*W the (H*W, TILE_DD) one-hot slab should be
    # band-restricted to the source rows touched by each output tile.
    samp = (corner(x0,       y0,       (1.0 - tx) * (1.0 - ty)) +
            corner(x0 + 1.0, y0,       tx * (1.0 - ty)) +
            corner(x0,       y0 + 1.0, (1.0 - tx) * ty) +
            corner(x0 + 1.0, y0 + 1.0, tx * ty))              # (hw, tile)

    # Single MXU matmul applies the shared sampling matrix to BOTH images:
    # (2C, H*W) @ (H*W, TILE_DD), bf16 operands, f32 accumulation.
    warped = jnp.dot(img_ref[0], samp.astype(jnp.bfloat16),
                     preferred_element_type=jnp.float32)
    out_ref[0] = (2.0 * warped - 1.0).astype(out_ref.dtype)   # (0,1)->(-1,1)


# ---------------------------------------------------------------------------
# Kernel 2: synthetic recog_net (linear) + L2 normalize + cosine + mean(1-cos).
# K-tiled matmul with a resident f32 accumulator; A/B stacked into (2B, K).
# ---------------------------------------------------------------------------
def _id_loss_kernel(x_ref, w_ref, b_ref, out_ref, acc_ref, *, n_pairs):
    k = pl.program_id(0)

    @pl.when(k == 0)
    def _():
        acc_ref[...] = jnp.zeros_like(acc_ref)

    acc_ref[...] += jnp.dot(x_ref[...], w_ref[...],
                            preferred_element_type=jnp.float32)

    @pl.when(k == pl.num_programs(0) - 1)
    def _():
        bias = b_ref[...]                                     # (1, F) f32
        fa = acc_ref[pl.ds(0, n_pairs), :] + bias             # (B, F)
        fb = acc_ref[pl.ds(n_pairs, n_pairs), :] + bias       # (B, F)
        # F.normalize(..., dim=-1, p=2, eps=1e-12): x / max(||x||, eps)
        na = fa / jnp.maximum(
            jnp.sqrt(jnp.sum(fa * fa, axis=-1, keepdims=True)), 1e-12)
        nb = fb / jnp.maximum(
            jnp.sqrt(jnp.sum(fb * fb, axis=-1, keepdims=True)), 1e-12)
        cos = jnp.sum(na * nb, axis=-1, keepdims=True)        # (B, 1)
        out_ref[...] = jnp.sum(1.0 - cos, keepdims=True) / n_pairs


# ---------------------------------------------------------------------------
# Plain-JAX glue.
# ---------------------------------------------------------------------------
def _invert_affine(M):
    """Invert a batch of 2x3 affine matrices (dst = A src + t)."""
    A = M[:, :, :2]
    t = M[:, :, 2:3]
    det = A[:, 0, 0] * A[:, 1, 1] - A[:, 0, 1] * A[:, 1, 0]
    Ainv = jnp.stack(
        [jnp.stack([A[:, 1, 1], -A[:, 0, 1]], axis=-1),
         jnp.stack([-A[:, 1, 0], A[:, 0, 0]], axis=-1)], axis=-2)
    Ainv = Ainv / det[:, None, None]
    tinv = -jnp.einsum('bij,bjk->bik', Ainv, t)
    return jnp.concatenate([Ainv, tinv], axis=-1)             # (B, 2, 3)


def perceptual_loss(imageA, imageB, M, recog_w, recog_b, input_size):
    """Equivalent of PerceptualLoss.forward(imageA, imageB, M)."""
    B, C, H, W = imageA.shape
    dsize = int(input_size)
    dd = dsize * dsize
    dd_pad = _round_up(dd, 128)            # lane-dense output slab

    # dst->src affine coefficients, delivered via scalar prefetch (SMEM).
    minv = _invert_affine(M.astype(jnp.float32)).reshape(B, 6)

    # Destination pixel coordinates precomputed here (no int div/mod on VPU).
    p = jnp.arange(dd_pad, dtype=jnp.int32)
    xo = (p % dsize).astype(jnp.float32)[None, :]             # (1, dd_pad)
    yo = (p // dsize).astype(jnp.float32)[None, :]

    # Fuse A/B: stack on the channel axis so the sampling matrix is built once
    # and applied with a single (2C, HW) @ (HW, TILE_DD) matmul per tile.
    imgs = jnp.concatenate([imageA, imageB], axis=1)
    imgs = imgs.reshape(B, 2 * C, H * W).astype(jnp.bfloat16)

    if dd_pad <= 512:
        tile_dd = dd_pad
    else:
        tile_dd = max(t for t in (512, 384, 256, 128) if dd_pad % t == 0)
    n_dd = dd_pad // tile_dd

    warped = pl.pallas_call(
        functools.partial(_warp_kernel, H=H, W=W),
        out_shape=jax.ShapeDtypeStruct((B, 2 * C, dd_pad), jnp.bfloat16),
        grid_spec=pltpu.PrefetchScalarGridSpec(
            num_scalar_prefetch=1,
            grid=(B, n_dd),
            in_specs=[
                pl.BlockSpec((1, tile_dd), lambda b, j, mv: (0, j)),
                pl.BlockSpec((1, tile_dd), lambda b, j, mv: (0, j)),
                pl.BlockSpec((1, 2 * C, H * W), lambda b, j, mv: (b, 0, 0)),
            ],
            out_specs=pl.BlockSpec((1, 2 * C, tile_dd),
                                   lambda b, j, mv: (b, 0, j)),
        ),
        compiler_params=pltpu.CompilerParams(
            dimension_semantics=("parallel", "parallel"),
            vmem_limit_bytes=32 * 1024 * 1024),
    )(minv, xo, yo, imgs)

    # Crop lane padding, flatten, stack A on top of B: (2B, K).
    K = C * dd
    wa = warped[:, :C, :dd].reshape(B, K)
    wb = warped[:, C:, :dd].reshape(B, K)
    x = jnp.concatenate([wa, wb], axis=0)                     # (2B, K) bf16

    feat = recog_w.shape[-1]
    tk = min(2048, _round_up(K, 128))
    K_pad = _round_up(K, tk)
    x = jnp.pad(x, ((0, 0), (0, K_pad - K)))
    w = jnp.pad(recog_w.astype(jnp.bfloat16), ((0, K_pad - K), (0, 0)))

    loss = pl.pallas_call(
        functools.partial(_id_loss_kernel, n_pairs=B),
        out_shape=jax.ShapeDtypeStruct((1, 1), jnp.float32),
        grid=(K_pad // tk,),
        in_specs=[
            pl.BlockSpec((2 * B, tk), lambda k: (0, k)),
            pl.BlockSpec((tk, feat), lambda k: (k, 0)),
            pl.BlockSpec((1, feat), lambda k: (0, 0)),
        ],
        out_specs=pl.BlockSpec((1, 1), lambda k: (0, 0)),
        scratch_shapes=[pltpu.VMEM((2 * B, feat), jnp.float32)],
        compiler_params=pltpu.CompilerParams(
            dimension_semantics=("arbitrary",),
            vmem_limit_bytes=32 * 1024 * 1024),
    )(x, w, recog_b.astype(jnp.float32))
    return loss[0, 0]


if __name__ == "__main__":
    B, C, H, W = 2, 3, 16, 16
    input_size = 16          # module default is 112; kept small for the test
    feat_dim = 64

    key = jax.random.PRNGKey(0)
    k1, k2, k3, k4 = jax.random.split(key, 4)

    imageA = jax.random.uniform(k1, (B, C, H, W), jnp.float32)   # range (0,1)
    imageB = jax.random.uniform(k2, (B, C, H, W), jnp.float32)

    # Mild per-sample affine transforms M (B, 2, 3), src -> dst convention.
    ang = jnp.array([0.05, -0.08], jnp.float32)
    sc = jnp.array([1.00, 0.95], jnp.float32)
    txy = jnp.array([[0.5, -0.3], [-1.0, 0.8]], jnp.float32)
    ca, sa = jnp.cos(ang) * sc, jnp.sin(ang) * sc
    M = jnp.stack(
        [jnp.stack([ca, -sa, txy[:, 0]], axis=-1),
         jnp.stack([sa, ca, txy[:, 1]], axis=-1)], axis=-2)      # (B, 2, 3)

    # Deterministic synthetic recog_net parameters (flatten -> linear).
    K = C * input_size * input_size
    recog_w = (jax.random.normal(k3, (K, feat_dim), jnp.float32)
               / jnp.sqrt(jnp.float32(K)))
    recog_b = 0.01 * jax.random.normal(k4, (1, feat_dim), jnp.float32)

    loss = perceptual_loss(imageA, imageB, M, recog_w, recog_b, input_size)
    jax.block_until_ready(loss)
    print("KERNEL_OK")
</pallas_src>

<mosaic_0001>
module attributes {stable_mosaic.version = 11 : i64} {
  func.func @_warp_kernel(%arg0: i32, %arg1: i32, %arg2: memref<2x6xf32, #tpu.memory_space<smem>>, %arg3: memref<1x256xf32, #tpu.memory_space<vmem>>, %arg4: memref<1x256xf32, #tpu.memory_space<vmem>>, %arg5: memref<1x6x256xbf16, #tpu.memory_space<vmem>>, %arg6: memref<1x6x256xbf16, #tpu.memory_space<vmem>>) attributes {dimension_semantics = [#tpu.dimension_semantics<parallel>, #tpu.dimension_semantics<parallel>], iteration_bounds = array<i64: 2, 1>, scalar_prefetch = 1 : i64, scratch_operands = 0 : i64, tpu.core_type = #tpu.core_type<tc>, window_params = [{transform_indices = @transform_0, window_bounds = array<i64: 1, 256>}, {transform_indices = @transform_1, window_bounds = array<i64: 1, 256>}, {transform_indices = @transform_2, window_bounds = array<i64: 1, 6, 256>}, {transform_indices = @transform_3, window_bounds = array<i64: 1, 6, 256>}]} {
    %0 = arith.index_cast %arg0 : i32 to index
    %c0 = arith.constant 0 : index
    %1 = memref.load %arg2[%0, %c0] : memref<2x6xf32, #tpu.memory_space<smem>>
    %2 = arith.index_cast %arg0 : i32 to index
    %c1 = arith.constant 1 : index
    %3 = memref.load %arg2[%2, %c1] : memref<2x6xf32, #tpu.memory_space<smem>>
    %4 = arith.index_cast %arg0 : i32 to index
    %c2 = arith.constant 2 : index
    %5 = memref.load %arg2[%4, %c2] : memref<2x6xf32, #tpu.memory_space<smem>>
    %6 = arith.index_cast %arg0 : i32 to index
    %c3 = arith.constant 3 : index
    %7 = memref.load %arg2[%6, %c3] : memref<2x6xf32, #tpu.memory_space<smem>>
    %8 = arith.index_cast %arg0 : i32 to index
    %c4 = arith.constant 4 : index
    %9 = memref.load %arg2[%8, %c4] : memref<2x6xf32, #tpu.memory_space<smem>>
    %10 = arith.index_cast %arg0 : i32 to index
    %c5 = arith.constant 5 : index
    %11 = memref.load %arg2[%10, %c5] : memref<2x6xf32, #tpu.memory_space<smem>>
    %c0_0 = arith.constant 0 : index
    %c0_1 = arith.constant 0 : index
    %12 = vector.load %arg3[%c0_0, %c0_1] : memref<1x256xf32, #tpu.memory_space<vmem>>, vector<1x256xf32>
    %c0_2 = arith.constant 0 : index
    %c0_3 = arith.constant 0 : index
    %13 = vector.load %arg4[%c0_2, %c0_3] : memref<1x256xf32, #tpu.memory_space<vmem>>, vector<1x256xf32>
    %14 = vector.broadcast %1 : f32 to vector<1x256xf32>
    %15 = arith.mulf %14, %12 : vector<1x256xf32>
    %16 = vector.broadcast %3 : f32 to vector<1x256xf32>
    %17 = arith.mulf %16, %13 : vector<1x256xf32>
    %18 = arith.addf %15, %17 : vector<1x256xf32>
    %19 = vector.broadcast %5 : f32 to vector<1x256xf32>
    %20 = arith.addf %18, %19 : vector<1x256xf32>
    %21 = vector.broadcast %7 : f32 to vector<1x256xf32>
    %22 = arith.mulf %21, %12 : vector<1x256xf32>
    %23 = vector.broadcast %9 : f32 to vector<1x256xf32>
    %24 = arith.mulf %23, %13 : vector<1x256xf32>
    %25 = arith.addf %22, %24 : vector<1x256xf32>
    %26 = vector.broadcast %11 : f32 to vector<1x256xf32>
    %27 = arith.addf %25, %26 : vector<1x256xf32>
    %28 = math.floor %20 : vector<1x256xf32>
    %29 = math.floor %27 : vector<1x256xf32>
    %30 = arith.subf %20, %28 : vector<1x256xf32>
    %31 = arith.subf %27, %29 : vector<1x256xf32>
    %32 = tpu.iota {dimensions = array<i32: 0>} : vector<256x256xi32>
    %cst = arith.constant 1.000000e+00 : f32
    %33 = vector.broadcast %cst : f32 to vector<1x256xf32>
    %34 = arith.subf %33, %30 : vector<1x256xf32>
    %cst_4 = arith.constant 1.000000e+00 : f32
    %35 = vector.broadcast %cst_4 : f32 to vector<1x256xf32>
    %36 = arith.subf %35, %31 : vector<1x256xf32>
    %37 = arith.mulf %34, %36 : vector<1x256xf32>
    %cst_5 = arith.constant 0.000000e+00 : f32
    %38 = vector.broadcast %cst_5 : f32 to vector<1x256xf32>
    %39 = arith.cmpf oge, %28, %38 : vector<1x256xf32>
    %cst_6 = arith.constant 1.500000e+01 : f32
    %40 = vector.broadcast %cst_6 : f32 to vector<1x256xf32>
    %41 = arith.cmpf ole, %28, %40 : vector<1x256xf32>
    %42 = arith.andi %39, %41 : vector<1x256xi1>
    %cst_7 = arith.constant 0.000000e+00 : f32
    %43 = vector.broadcast %cst_7 : f32 to vector<1x256xf32>
    %44 = arith.cmpf oge, %29, %43 : vector<1x256xf32>
    %45 = arith.andi %42, %44 : vector<1x256xi1>
    %cst_8 = arith.constant 1.500000e+01 : f32
    %46 = vector.broadcast %cst_8 : f32 to vector<1x256xf32>
    %47 = arith.cmpf ole, %29, %46 : vector<1x256xf32>
    %48 = arith.andi %45, %47 : vector<1x256xi1>
    %cst_9 = arith.constant 0.000000e+00 : f32
    %49 = vector.broadcast %cst_9 : f32 to vector<1x256xf32>
    %50 = arith.select %48, %37, %49 : vector<1x256xi1>, vector<1x256xf32>
    %cst_10 = arith.constant 0.000000e+00 : f32
    %cst_11 = arith.constant 1.500000e+01 : f32
    %51 = vector.broadcast %cst_10 : f32 to vector<1x256xf32>
    %52 = arith.maximumf %51, %28 : vector<1x256xf32>
    %53 = vector.broadcast %cst_11 : f32 to vector<1x256xf32>
    %54 = arith.minimumf %53, %52 : vector<1x256xf32>
    %55 = arith.fptosi %54 : vector<1x256xf32> to vector<1x256xi32>
    %cst_12 = arith.constant 0.000000e+00 : f32
    %cst_13 = arith.constant 1.500000e+01 : f32
    %56 = vector.broadcast %cst_12 : f32 to vector<1x256xf32>
    %57 = arith.maximumf %56, %29 : vector<1x256xf32>
    %58 = vector.broadcast %cst_13 : f32 to vector<1x256xf32>
    %59 = arith.minimumf %58, %57 : vector<1x256xf32>
    %60 = arith.fptosi %59 : vector<1x256xf32> to vector<1x256xi32>
    %c16_i32 = arith.constant 16 : i32
    %61 = vector.broadcast %c16_i32 : i32 to vector<1x256xi32>
    %62 = arith.muli %60, %61 : vector<1x256xi32>
    %63 = arith.addi %62, %55 : vector<1x256xi32>
    %64 = vector.broadcast %63 : vector<1x256xi32> to vector<256x256xi32>
    %65 = arith.cmpi eq, %32, %64 : vector<256x256xi32>
    %cst_14 = arith.constant 0.000000e+00 : f32
    %66 = vector.shape_cast %50 : vector<1x256xf32> to vector<1x256xf32>
    %67 = vector.broadcast %66 : vector<1x256xf32> to vector<256x256xf32>
    %68 = vector.broadcast %cst_14 : f32 to vector<256x256xf32>
    %69 = arith.select %65, %67, %68 : vector<256x256xi1>, vector<256x256xf32>
    %cst_15 = arith.constant 1.000000e+00 : f32
    %70 = vector.broadcast %cst_15 : f32 to vector<1x256xf32>
    %71 = arith.addf %28, %70 : vector<1x256xf32>
    %cst_16 = arith.constant 1.000000e+00 : f32
    %72 = vector.broadcast %cst_16 : f32 to vector<1x256xf32>
    %73 = arith.subf %72, %31 : vector<1x256xf32>
    %74 = arith.mulf %30, %73 : vector<1x256xf32>
    %cst_17 = arith.constant 0.000000e+00 : f32
    %75 = vector.broadcast %cst_17 : f32 to vector<1x256xf32>
    %76 = arith.cmpf oge, %71, %75 : vector<1x256xf32>
    %cst_18 = arith.constant 1.500000e+01 : f32
    %77 = vector.broadcast %cst_18 : f32 to vector<1x256xf32>
    %78 = arith.cmpf ole, %71, %77 : vector<1x256xf32>
    %79 = arith.andi %76, %78 : vector<1x256xi1>
    %cst_19 = arith.constant 0.000000e+00 : f32
    %80 = vector.broadcast %cst_19 : f32 to vector<1x256xf32>
    %81 = arith.cmpf oge, %29, %80 : vector<1x256xf32>
    %82 = arith.andi %79, %81 : vector<1x256xi1>
    %cst_20 = arith.constant 1.500000e+01 : f32
    %83 = vector.broadcast %cst_20 : f32 to vector<1x256xf32>
    %84 = arith.cmpf ole, %29, %83 : vector<1x256xf32>
    %85 = arith.andi %82, %84 : vector<1x256xi1>
    %cst_21 = arith.constant 0.000000e+00 : f32
    %86 = vector.broadcast %cst_21 : f32 to vector<1x256xf32>
    %87 = arith.select %85, %74, %86 : vector<1x256xi1>, vector<1x256xf32>
    %cst_22 = arith.constant 0.000000e+00 : f32
    %cst_23 = arith.constant 1.500000e+01 : f32
    %88 = vector.broadcast %cst_22 : f32 to vector<1x256xf32>
    %89 = arith.maximumf %88, %71 : vector<1x256xf32>
    %90 = vector.broadcast %cst_23 : f32 to vector<1x256xf32>
    %91 = arith.minimumf %90, %89 : vector<1x256xf32>
    %92 = arith.fptosi %91 : vector<1x256xf32> to vector<1x256xi32>
    %cst_24 = arith.constant 0.000000e+00 : f32
    %cst_25 = arith.constant 1.500000e+01 : f32
    %93 = vector.broadcast %cst_24 : f32 to vector<1x256xf32>
    %94 = arith.maximumf %93, %29 : vector<1x256xf32>
    %95 = vector.broadcast %cst_25 : f32 to vector<1x256xf32>
    %96 = arith.minimumf %95, %94 : vector<1x256xf32>
    %97 = arith.fptosi %96 : vector<1x256xf32> to vector<1x256xi32>
    %c16_i32_26 = arith.constant 16 : i32
    %98 = vector.broadcast %c16_i32_26 : i32 to vector<1x256xi32>
    %99 = arith.muli %97, %98 : vector<1x256xi32>
    %100 = arith.addi %99, %92 : vector<1x256xi32>
    %101 = vector.broadcast %100 : vector<1x256xi32> to vector<256x256xi32>
    %102 = arith.cmpi eq, %32, %101 : vector<256x256xi32>
    %cst_27 = arith.constant 0.000000e+00 : f32
    %103 = vector.shape_cast %87 : vector<1x256xf32> to vector<1x256xf32>
    %104 = vector.broadcast %103 : vector<1x256xf32> to vector<256x256xf32>
    %105 = vector.broadcast %cst_27 : f32 to vector<256x256xf32>
    %106 = arith.select %102, %104, %105 : vector<256x256xi1>, vector<256x256xf32>
    %107 = arith.addf %69, %106 : vector<256x256xf32>
    %cst_28 = arith.constant 1.000000e+00 : f32
    %108 = vector.broadcast %cst_28 : f32 to vector<1x256xf32>
    %109 = arith.addf %29, %108 : vector<1x256xf32>
    %cst_29 = arith.constant 1.000000e+00 : f32
    %110 = vector.broadcast %cst_29 : f32 to vector<1x256xf32>
    %111 = arith.subf %110, %30 : vector<1x256xf32>
    %112 = arith.mulf %111, %31 : vector<1x256xf32>
    %cst_30 = arith.constant 0.000000e+00 : f32
    %113 = vector.broadcast %cst_30 : f32 to vector<1x256xf32>
    %114 = arith.cmpf oge, %28, %113 : vector<1x256xf32>
    %cst_31 = arith.constant 1.500000e+01 : f32
    %115 = vector.broadcast %cst_31 : f32 to vector<1x256xf32>
    %116 = arith.cmpf ole, %28, %115 : vector<1x256xf32>
    %117 = arith.andi %114, %116 : vector<1x256xi1>
    %cst_32 = arith.constant 0.000000e+00 : f32
    %118 = vector.broadcast %cst_32 : f32 to vector<1x256xf32>
    %119 = arith.cmpf oge, %109, %118 : vector<1x256xf32>
    %120 = arith.andi %117, %119 : vector<1x256xi1>
    %cst_33 = arith.constant 1.500000e+01 : f32
    %121 = vector.broadcast %cst_33 : f32 to vector<1x256xf32>
    %122 = arith.cmpf ole, %109, %121 : vector<1x256xf32>
    %123 = arith.andi %120, %122 : vector<1x256xi1>
    %cst_34 = arith.constant 0.000000e+00 : f32
    %124 = vector.broadcast %cst_34 : f32 to vector<1x256xf32>
    %125 = arith.select %123, %112, %124 : vector<1x256xi1>, vector<1x256xf32>
    %cst_35 = arith.constant 0.000000e+00 : f32
    %cst_36 = arith.constant 1.500000e+01 : f32
    %126 = vector.broadcast %cst_35 : f32 to vector<1x256xf32>
    %127 = arith.maximumf %126, %28 : vector<1x256xf32>
    %128 = vector.broadcast %cst_36 : f32 to vector<1x256xf32>
    %129 = arith.minimumf %128, %127 : vector<1x256xf32>
    %130 = arith.fptosi %129 : vector<1x256xf32> to vector<1x256xi32>
    %cst_37 = arith.constant 0.000000e+00 : f32
    %cst_38 = arith.constant 1.500000e+01 : f32
    %131 = vector.broadcast %cst_37 : f32 to vector<1x256xf32>
    %132 = arith.maximumf %131, %109 : vector<1x256xf32>
    %133 = vector.broadcast %cst_38 : f32 to vector<1x256xf32>
    %134 = arith.minimumf %133, %132 : vector<1x256xf32>
    %135 = arith.fptosi %134 : vector<1x256xf32> to vector<1x256xi32>
    %c16_i32_39 = arith.constant 16 : i32
    %136 = vector.broadcast %c16_i32_39 : i32 to vector<1x256xi32>
    %137 = arith.muli %135, %136 : vector<1x256xi32>
    %138 = arith.addi %137, %130 : vector<1x256xi32>
    %139 = vector.broadcast %138 : vector<1x256xi32> to vector<256x256xi32>
    %140 = arith.cmpi eq, %32, %139 : vector<256x256xi32>
    %cst_40 = arith.constant 0.000000e+00 : f32
    %141 = vector.shape_cast %125 : vector<1x256xf32> to vector<1x256xf32>
    %142 = vector.broadcast %141 : vector<1x256xf32> to vector<256x256xf32>
    %143 = vector.broadcast %cst_40 : f32 to vector<256x256xf32>
    %144 = arith.select %140, %142, %143 : vector<256x256xi1>, vector<256x256xf32>
    %145 = arith.addf %107, %144 : vector<256x256xf32>
    %cst_41 = arith.constant 1.000000e+00 : f32
    %146 = vector.broadcast %cst_41 : f32 to vector<1x256xf32>
    %147 = arith.addf %28, %146 : vector<1x256xf32>
    %cst_42 = arith.constant 1.000000e+00 : f32
    %148 = vector.broadcast %cst_42 : f32 to vector<1x256xf32>
    %149 = arith.addf %29, %148 : vector<1x256xf32>
    %150 = arith.mulf %30, %31 : vector<1x256xf32>
    %cst_43 = arith.constant 0.000000e+00 : f32
    %151 = vector.broadcast %cst_43 : f32 to vector<1x256xf32>
    %152 = arith.cmpf oge, %147, %151 : vector<1x256xf32>
    %cst_44 = arith.constant 1.500000e+01 : f32
    %153 = vector.broadcast %cst_44 : f32 to vector<1x256xf32>
    %154 = arith.cmpf ole, %147, %153 : vector<1x256xf32>
    %155 = arith.andi %152, %154 : vector<1x256xi1>
    %cst_45 = arith.constant 0.000000e+00 : f32
    %156 = vector.broadcast %cst_45 : f32 to vector<1x256xf32>
    %157 = arith.cmpf oge, %149, %156 : vector<1x256xf32>
    %158 = arith.andi %155, %157 : vector<1x256xi1>
    %cst_46 = arith.constant 1.500000e+01 : f32
    %159 = vector.broadcast %cst_46 : f32 to vector<1x256xf32>
    %160 = arith.cmpf ole, %149, %159 : vector<1x256xf32>
    %161 = arith.andi %158, %160 : vector<1x256xi1>
    %cst_47 = arith.constant 0.000000e+00 : f32
    %162 = vector.broadcast %cst_47 : f32 to vector<1x256xf32>
    %163 = arith.select %161, %150, %162 : vector<1x256xi1>, vector<1x256xf32>
    %cst_48 = arith.constant 0.000000e+00 : f32
    %cst_49 = arith.constant 1.500000e+01 : f32
    %164 = vector.broadcast %cst_48 : f32 to vector<1x256xf32>
    %165 = arith.maximumf %164, %147 : vector<1x256xf32>
    %166 = vector.broadcast %cst_49 : f32 to vector<1x256xf32>
    %167 = arith.minimumf %166, %165 : vector<1x256xf32>
    %168 = arith.fptosi %167 : vector<1x256xf32> to vector<1x256xi32>
    %cst_50 = arith.constant 0.000000e+00 : f32
    %cst_51 = arith.constant 1.500000e+01 : f32
    %169 = vector.broadcast %cst_50 : f32 to vector<1x256xf32>
    %170 = arith.maximumf %169, %149 : vector<1x256xf32>
    %171 = vector.broadcast %cst_51 : f32 to vector<1x256xf32>
    %172 = arith.minimumf %171, %170 : vector<1x256xf32>
    %173 = arith.fptosi %172 : vector<1x256xf32> to vector<1x256xi32>
    %c16_i32_52 = arith.constant 16 : i32
    %174 = vector.broadcast %c16_i32_52 : i32 to vector<1x256xi32>
    %175 = arith.muli %173, %174 : vector<1x256xi32>
    %176 = arith.addi %175, %168 : vector<1x256xi32>
    %177 = vector.broadcast %176 : vector<1x256xi32> to vector<256x256xi32>
    %178 = arith.cmpi eq, %32, %177 : vector<256x256xi32>
    %cst_53 = arith.constant 0.000000e+00 : f32
    %179 = vector.shape_cast %163 : vector<1x256xf32> to vector<1x256xf32>
    %180 = vector.broadcast %179 : vector<1x256xf32> to vector<256x256xf32>
    %181 = vector.broadcast %cst_53 : f32 to vector<256x256xf32>
    %182 = arith.select %178, %180, %181 : vector<256x256xi1>, vector<256x256xf32>
    %183 = arith.addf %145, %182 : vector<256x256xf32>
    %c0_54 = arith.constant 0 : index
    %c0_55 = arith.constant 0 : index
    %c0_56 = arith.constant 0 : index
    %184 = vector.load %arg5[%c0_54, %c0_55, %c0_56] : memref<1x6x256xbf16, #tpu.memory_space<vmem>>, vector<1x6x256xbf16>
    %185 = vector.shape_cast %184 : vector<1x6x256xbf16> to vector<6x256xbf16>
    %186 = arith.truncf %183 : vector<256x256xf32> to vector<256x256xbf16>
    %cst_57 = arith.constant dense<0.000000e+00> : vector<6x256xf32>
    %187 = tpu.matmul %185, %186, %cst_57 {dimension_numbers = #tpu.dot_dimension_numbers<[1], [0], [0], [1], [0, 0, 1, 1], [], []>} : vector<6x256xbf16>, vector<256x256xbf16>, vector<6x256xf32> -> vector<6x256xf32>
    %cst_58 = arith.constant 2.000000e+00 : f32
    %188 = vector.broadcast %cst_58 : f32 to vector<6x256xf32>
    %189 = arith.mulf %188, %187 : vector<6x256xf32>
    %cst_59 = arith.constant 1.000000e+00 : f32
    %190 = vector.broadcast %cst_59 : f32 to vector<6x256xf32>
    %191 = arith.subf %189, %190 : vector<6x256xf32>
    %192 = arith.truncf %191 : vector<6x256xf32> to vector<6x256xbf16>
    %c0_60 = arith.constant 0 : index
    %c0_61 = arith.constant 0 : index
    %c0_62 = arith.constant 0 : index
    %193 = vector.load %arg6[%c0_60, %c0_61, %c0_62] : memref<1x6x256xbf16, #tpu.memory_space<vmem>>, vector<1x6x256xbf16>
    %194 = vector.shape_cast %193 : vector<1x6x256xbf16> to vector<6x256xbf16>
    %195 = vector.shape_cast %192 : vector<6x256xbf16> to vector<1x6x256xbf16>
    tpu.vector_store %arg6[%c0_60, %c0_61, %c0_62], %195 {strides = array<i32>} : memref<1x6x256xbf16, #tpu.memory_space<vmem>>, vector<1x6x256xbf16>,
    return
  }
  func.func @transform_0(%arg0: i32, %arg1: i32, %arg2: memref<2x6xf32, #tpu.memory_space<smem>>) -> (i32, i32) {
    %c0_i32 = arith.constant 0 : i32
    %c0_i32_0 = arith.constant 0 : i32
    return %c0_i32, %arg1 : i32, i32
  }
  func.func @transform_1(%arg0: i32, %arg1: i32, %arg2: memref<2x6xf32, #tpu.memory_space<smem>>) -> (i32, i32) {
    %c0_i32 = arith.constant 0 : i32
    %c0_i32_0 = arith.constant 0 : i32
    return %c0_i32, %arg1 : i32, i32
  }
  func.func @transform_2(%arg0: i32, %arg1: i32, %arg2: memref<2x6xf32, #tpu.memory_space<smem>>) -> (i32, i32, i32) {
    %c0_i32 = arith.constant 0 : i32
    %c0_i32_0 = arith.constant 0 : i32
    %c0_i32_1 = arith.constant 0 : i32
    return %arg0, %c0_i32, %c0_i32_0 : i32, i32, i32
  }
  func.func @transform_3(%arg0: i32, %arg1: i32, %arg2: memref<2x6xf32, #tpu.memory_space<smem>>) -> (i32, i32, i32) {
    %c0_i32 = arith.constant 0 : i32
    %c0_i32_0 = arith.constant 0 : i32
    return %arg0, %c0_i32, %arg1 : i32, i32, i32
  }
}

</mosaic_0001>

<llo_original>
// kernel: tpu_custom_call.1
$region0: #{tpu_custom_call.1}
  #allocation0 [shape = 'u32[]', space=smem, size = 0x4, offset = 0x4, fixed_abs, tag = 'smem constant byte address 0x4 - core index']
  #allocation1 [shape = 'u32[144,128]{1,0:T(1,128)}', space=vmem, size = 0x12000, scoped, tag = 'internal scratch']
  #allocation2 [shape = 's32[1]{0}', space=sflag, size = 0x4, scoped, tag = 'scoped memory for tpu_custom_call.1']
  #allocation3 [shape = 'u8[1024]{0}', space=smem, size = 0x400, scoped, tag = 'prefetched SMEM operand 0']
  %s0 = inlined_call_operand.vmem [shape: f32[2,6], index: 0, kind: input, shape index: {}]
  %s1 = inlined_call_operand.vmem [shape: f32[1,256], index: 1, kind: input, shape index: {}]
  %s2 = inlined_call_operand.vmem [shape: f32[1,256], index: 2, kind: input, shape index: {}]
  %s3 = inlined_call_operand.vmem [shape: bf16[2,6,256], index: 3, kind: input, shape index: {}]
  %s4 = inlined_call_operand.vmem [shape: bf16[2,6,256], index: 4, kind: output, shape index: {}]
  %s5 = sld [smem:[#allocation0]]
  $region45: #{tpu_custom_call.1} parent=0
    _
  %s7 = ssub.s32 1, %s5
  %s8 = scalar_select 0, %s7, %s5
  %s9 = sshll.u32 %s0, 4
  %s10 = int_to_ptr.vmem [resolvable:$true] %s9
  %12 = dma.vmem_to_smem %s10, 32, [#allocation3], [#allocation2]
  %13 = dma.done [#allocation2], 32
  %14 = sfence
  loop: start=0, step=1, limit=4
  $region2: #{tpu_custom_call.1} parent=0 // loop_pre_header
    _
  $region3: #{tpu_custom_call.1} parent=0 // loop_header
    %s16 = sphi 0, %s20
    %p17 = scmp.ge.s32.totalorder %s16, 4
    %s23 = sphi 0, %s35
    %s24 = sphi 0, %s31
    %s25 = sphi 0, %s23
    %s26 = sphi 0, %s24
    %s27 = sphi 0, %s25
    %s28 = sphi 0, %s26
    %s38 = sphi 0, %s40
    %s41 = sphi 0, %s38
    %s42 = sphi 0, %s41
    %s58 = sphi 0, %s42
    %s64 = sphi 0, %s66
    %s67 = sphi 0, %s64
    %s68 = sphi 0, %s67
    %s84 = sphi 0, %s68
    %s90 = sphi 0, %s92
    %s93 = sphi 0, %s90
    %s94 = sphi 0, %s93
    %s110 = sphi 0, %s94
    %s118 = sphi 0, %s120
    %s121 = sphi 0, %s118
    %s122 = sphi 0, %s121
    %s138 = sphi 0, %s122
  $region4: #{tpu_custom_call.1} parent=0 // loop_header_branch
    %19 = sbr.rel (%p17) target = $region8
  $region5: #{tpu_custom_call.1} parent=0 // loop_body
    %s21 = ssub.s32 %s16, 1
    %s22 = ssub.s32 %s16, 2
    %s29 = sadd.s32 1, %s24
    %p30 = scmp.ge.s32.totalorder %s29, 1
    %s31 = scalar_select %p30, 0, %s29
    %s32 = sadd.s32 1, %s23
    %s33 = scalar_select %p30, %s32, %s23
    %p34 = scmp.ge.s32.totalorder %s33, 2
    %s35 = scalar_select %p34, 0, %s33
    %s36 = ssub.s32 %s24, %s31
    %p37 = scmp.eq.s32.totalorder %s36, 0
    %s39 = sadd.s32 %s38, 1
    %s40 = scalar_select %p37, %s38, %s39
    %p43 = pneg %p37
    %p44 = scmp.eq.s32.totalorder %s16, 1
    %p45 = por %p43, %p44
    %p46 = scmp.ne.s32.totalorder %s38, %s41
    %p47 = scmp.eq.s32.totalorder %s16, 0
    %p48 = por %p46, %p47
    %p49 = scmp.ne.s32.totalorder %s38, %s41
    %p50 = scmp.eq.s32.totalorder %s21, 1
    %p51 = por %p49, %p50
    %p52 = scmp.ne.s32.totalorder %s41, %s42
    %p53 = scmp.eq.s32.totalorder %s21, 0
    %p54 = por %p52, %p53
    %p55 = scmp.ne.s32.totalorder %s41, %s42
    %p56 = scmp.eq.s32.totalorder %s22, 1
    %p57 = por %p55, %p56
    %p59 = scmp.ne.s32.totalorder %s42, %s58
    %p60 = scmp.eq.s32.totalorder %s22, 0
    %p61 = por %p59, %p60
    %s62 = ssub.s32 %s24, %s31
    %p63 = scmp.eq.s32.totalorder %s62, 0
    %s65 = sadd.s32 %s64, 1
    %s66 = scalar_select %p63, %s64, %s65
    %p69 = pneg %p63
    %p70 = scmp.eq.s32.totalorder %s16, 1
    %p71 = por %p69, %p70
    %p72 = scmp.ne.s32.totalorder %s64, %s67
    %p73 = scmp.eq.s32.totalorder %s16, 0
    %p74 = por %p72, %p73
    %p75 = scmp.ne.s32.totalorder %s64, %s67
    %p76 = scmp.eq.s32.totalorder %s21, 1
    %p77 = por %p75, %p76
    %p78 = scmp.ne.s32.totalorder %s67, %s68
    %p79 = scmp.eq.s32.totalorder %s21, 0
    %p80 = por %p78, %p79
    %p81 = scmp.ne.s32.totalorder %s67, %s68
    %p82 = scmp.eq.s32.totalorder %s22, 1
    %p83 = por %p81, %p82
    %p85 = scmp.ne.s32.totalorder %s68, %s84
    %p86 = scmp.eq.s32.totalorder %s22, 0
    %p87 = por %p85, %p86
    %s88 = ssub.s32 %s23, %s35
    %p89 = scmp.eq.s32.totalorder %s88, 0
    %s91 = sadd.s32 %s90, 1
    %s92 = scalar_select %p89, %s90, %s91
    %p95 = pneg %p89
    %p96 = scmp.eq.s32.totalorder %s16, 1
    %p97 = por %p95, %p96
    %p98 = scmp.ne.s32.totalorder %s90, %s93
    %p99 = scmp.eq.s32.totalorder %s16, 0
    %p100 = por %p98, %p99
    %p101 = scmp.ne.s32.totalorder %s90, %s93
    %p102 = scmp.eq.s32.totalorder %s21, 1
    %p103 = por %p101, %p102
    %p104 = scmp.ne.s32.totalorder %s93, %s94
    %p105 = scmp.eq.s32.totalorder %s21, 0
    %p106 = por %p104, %p105
    %p107 = scmp.ne.s32.totalorder %s93, %s94
    %p108 = scmp.eq.s32.totalorder %s22, 1
    %p109 = por %p107, %p108
    %p111 = scmp.ne.s32.totalorder %s94, %s110
    %p112 = scmp.eq.s32.totalorder %s22, 0
    %p113 = por %p111, %p112
    %s114 = ssub.s32 %s23, %s35
    %s115 = ssub.s32 %s24, %s31
    %s116 = sor.u32 %s114, %s115
    %p117 = scmp.eq.s32.totalorder %s116, 0
    %s119 = sadd.s32 %s118, 1
    %s120 = scalar_select %p117, %s118, %s119
    %p123 = pneg %p117
    %p124 = scmp.eq.s32.totalorder %s16, 1
    %p125 = por %p123, %p124
    %p126 = scmp.ne.s32.totalorder %s118, %s121
    %p127 = scmp.eq.s32.totalorder %s16, 0
    %p128 = por %p126, %p127
    %p129 = scmp.ne.s32.totalorder %s118, %s121
    %p130 = scmp.eq.s32.totalorder %s21, 1
    %p131 = por %p129, %p130
    %p132 = scmp.ne.s32.totalorder %s121, %s122
    %p133 = scmp.eq.s32.totalorder %s21, 0
    %p134 = por %p132, %p133
    %p135 = scmp.ne.s32.totalorder %s121, %s122
    %p136 = scmp.eq.s32.totalorder %s22, 1
    %p137 = por %p135, %p136
    %p139 = scmp.ne.s32.totalorder %s122, %s138
    %p140 = scmp.eq.s32.totalorder %s22, 0
    %p141 = por %p139, %p140
    %p142 = scmp.le.s32.totalorder 1, %s16
    %p143 = scmp.lt.s32.totalorder %s16, 3
    %p144 = pnand %p142, %p143
    %p145 = pneg %p144
    // Predicated region
    $region9: #{tpu_custom_call.1} parent=5 // pred_check
      _
    $region10: #{tpu_custom_call.1} parent=5 // pred_check_branch
      %147 = sbr.rel (%p144) target = $region12
    $region11: #{tpu_custom_call.1} parent=5 // pred_region
      %s148 = ssub.s32 %s16, 1
      // Predicated region
      $region13: #{tpu_custom_call.1} parent=11 // pred_check
        %p149 = pneg %p54
      $region14: #{tpu_custom_call.1} parent=11 // pred_check_branch
        %151 = sbr.rel (%p149) target = $region16
      $region15: #{tpu_custom_call.1} parent=11 // pred_region
        %s152 = smul.u32 2, %s26
        %p153 = scmp.lt.s32.totalorder %s152, 1
        %s154 = scalar_select %p153, %s152, 1
        %s155 = scalar_lea.vmem %s1, %s154
        %s156 = smul.u32 2, %s26
      $region16: #{tpu_custom_call.1} parent=11 // pred_fallthru
        _
      // Predicated region
      $region17: #{tpu_custom_call.1} parent=11 // pred_check
        %p157 = pneg %p80
      $region18: #{tpu_custom_call.1} parent=11 // pred_check_branch
        %159 = sbr.rel (%p157) target = $region20
      $region19: #{tpu_custom_call.1} parent=11 // pred_region
        %s160 = smul.u32 2, %s26
        %p161 = scmp.lt.s32.totalorder %s160, 1
        %s162 = scalar_select %p161, %s160, 1
        %s163 = scalar_lea.vmem %s2, %s162
        %s164 = smul.u32 2, %s26
      $region20: #{tpu_custom_call.1} parent=11 // pred_fallthru
        _
    $region12: #{tpu_custom_call.1} parent=5 // pred_fallthru
      _
    %p165 = scmp.lt.s32.totalorder %s16, 2
    // Predicated region
    $region21: #{tpu_custom_call.1} parent=5 // pred_check
      %p166 = pneg %p165
    $region22: #{tpu_custom_call.1} parent=5 // pred_check_branch
      %168 = sbr.rel (%p166) target = $region24
    $region23: #{tpu_custom_call.1} parent=5 // pred_region
      // Predicated region
      $region25: #{tpu_custom_call.1} parent=23 // pred_check
        %p169 = pneg %p100
      $region26: #{tpu_custom_call.1} parent=23 // pred_check_branch
        %171 = sbr.rel (%p169) target = $region28
      $region27: #{tpu_custom_call.1} parent=23 // pred_region
        %p172 = scmp.lt.s32.totalorder %s23, 1
        %s173 = scalar_select %p172, %s23, 1
        %s174 = smul.addr %s173, 2
        %s175 = smul.addr %s174, 4
        %s176 = scalar_lea.vmem %s3, %s175
      $region28: #{tpu_custom_call.1} parent=23 // pred_fallthru
        _
    $region24: #{tpu_custom_call.1} parent=5 // pred_fallthru
      _
    %p177 = scmp.le.s32.totalorder 1, %s16
    %p178 = scmp.lt.s32.totalorder %s16, 3
    %p179 = pnand %p177, %p178
    %p180 = pneg %p179
    // Predicated region
    $region29: #{tpu_custom_call.1} parent=5 // pred_check
      _
    $region30: #{tpu_custom_call.1} parent=5 // pred_check_branch
      %182 = sbr.rel (%p179) target = $region32
    $region31: #{tpu_custom_call.1} parent=5 // pred_region
      %s183 = ssub.s32 %s16, 1
      %s184 = smul.u32 2, %s26
      %p185 = scmp.lt.s32.totalorder %s184, 1
      %s186 = scalar_select %p185, %s184, 1
      %s187 = scalar_lea.vmem %s1, %s186
      %p188 = pneg %p54
      %p189 = pneg %p51
      %s190 = smul.u32 2, %s26
      %p191 = scmp.lt.s32.totalorder %s190, 1
      %s192 = scalar_select %p191, %s190, 1
      %s193 = scalar_lea.vmem %s2, %s192
      %p194 = pneg %p80
      %p195 = pneg %p77
      %p196 = scmp.lt.s32.totalorder %s25, 1
      %s197 = scalar_select %p196, %s25, 1
      %s198 = smul.addr %s197, 2
      %s199 = smul.addr %s198, 4
      %s200 = scalar_lea.vmem %s3, %s199
      %p201 = pneg %p106
      %p202 = pneg %p103
      %p203 = pneg %p134
      %p204 = pneg %p131
      %s205 = smul.u32 2, %s26
      %p206 = scmp.lt.s32.totalorder %s25, 1
      %s207 = scalar_select %p206, %s25, 1
      %p208 = scmp.lt.s32.totalorder %s205, 1
      %s209 = scalar_select %p208, %s205, 1
      %s210 = smul.addr %s207, 2
      %s211 = sadd.s32 %s209, %s210
      %s212 = smul.addr %s211, 4
      %s213 = scalar_lea.vmem %s4, %s212
      %s214 = smul.u32 2, %s26
      %p215 = scmp.lt.s32.totalorder %s214, 1
      %s216 = scalar_select %p215, %s214, 1
      %s217 = scalar_lea.vmem %s1, %s216
      %s218 = smul.u32 2, %s26
      %s219 = smul.u32 2, %s26
      %p220 = scmp.lt.s32.totalorder %s219, 1
      %s221 = scalar_select %p220, %s219, 1
      %s222 = scalar_lea.vmem %s2, %s221
      %s223 = smul.u32 2, %s26
      %p224 = scmp.lt.s32.totalorder %s25, 1
      %s225 = scalar_select %p224, %s25, 1
      %s226 = smul.addr %s225, 2
      %s227 = smul.addr %s226, 4
      %s228 = scalar_lea.vmem %s3, %s227
      %s229 = smul.u32 2, %s26
      %p230 = scmp.lt.s32.totalorder %s25, 1
      %s231 = scalar_select %p230, %s25, 1
      %p232 = scmp.lt.s32.totalorder %s229, 1
      %s233 = scalar_select %p232, %s229, 1
      %s234 = smul.addr %s231, 2
      %s235 = sadd.s32 %s233, %s234
      %s236 = smul.addr %s235, 4
      %s237 = scalar_lea.vmem %s4, %s236
      %s238 = smul.u32 2, %s26
      %s239 = smul.u32 %s25, 128
      %s240 = sld [smem:[#allocation3 + %s239]]
      %s241 = sadd.s32 %s239, 1
      %s242 = sld [smem:[#allocation3 + %s241]]
      %s243 = sadd.s32 %s239, 2
      %s244 = sld [smem:[#allocation3 + %s243]]
      %s245 = sadd.s32 %s239, 3
      %s246 = sld [smem:[#allocation3 + %s245]]
      %s247 = sadd.s32 %s239, 4
      %s248 = sld [smem:[#allocation3 + %s247]]
      %s249 = sadd.s32 %s239, 5
      %s250 = sld [smem:[#allocation3 + %s249]]
      %v251 = vld [vmem:[%s217] sm:$0x3]
      %v252 = vld [vmem:[%s222] sm:$0x3]
      %v253 = vstv %s240
      %v254 = vmul.f32 %v253, %v251
      %v255 = vstv %s242
      %v256 = vmul.f32 %v255, %v252
      %v257 = vadd.f32 %v254, %v256
      %v258 = vstv %s244
      %v259 = vadd.f32 %v257, %v258
      %v260 = vstv %s246
      %v261 = vmul.f32 %v260, %v251
      %v262 = vstv %s248
      %v263 = vmul.f32 %v262, %v252
      %v264 = vadd.f32 %v261, %v263
      %v265 = vstv %s250
      %v266 = vadd.f32 %v264, %v265
      %v267 = vfloor.f32 %v259
      %v268 = vfloor.f32 %v266
      %v269 = vsub.f32 %v259, %v267
      %v270 = vsub.f32 %v266, %v268
      %v271 = vlaneseq
      %v272 = vshrl.u32 %v271, 7
      %v273 = vadd.s32 %v272, 8
      %v274 = vadd.s32 %v272, 16
      %v275 = vadd.s32 %v272, 24
      %v276 = vadd.s32 %v272, 32
      %v277 = vadd.s32 %v272, 40
      %v278 = vadd.s32 %v272, 48
      %v279 = vadd.s32 %v272, 56
      %v280 = vadd.s32 %v272, 64
      %v281 = vadd.s32 %v272, 72
      %v282 = vadd.s32 %v272, 80
      %v283 = vadd.s32 %v272, 88
      %v284 = vadd.s32 %v272, 96
      %v285 = vadd.s32 %v272, 104
      %v286 = vadd.s32 %v272, 112
      %v287 = vadd.s32 %v272, 120
      %v288 = vadd.s32 %v272, 128
      %v289 = vadd.s32 %v272, 136
      %v290 = vadd.s32 %v272, 144
      %v291 = vadd.s32 %v272, 152
      %v292 = vadd.s32 %v272, 160
      %v293 = vadd.s32 %v272, 168
      %v294 = vadd.s32 %v272, 176
      %v295 = vadd.s32 %v272, 184
      %v296 = vadd.s32 %v272, 192
      %v297 = vadd.s32 %v272, 200
      %v298 = vadd.s32 %v272, 208
      %v299 = vadd.s32 %v272, 216
      %v300 = vadd.s32 %v272, 224
      %v301 = vadd.s32 %v272, 232
      %v302 = vadd.s32 %v272, 240
      %v303 = vadd.s32 %v272, 248
      %v304 = vsub.f32 1.0, %v269
      %v305 = vsub.f32 1.0, %v270
      %v306 = vmul.f32 %v304, %v305
      %vm307 = vcmp.ge.f32.partialorder %v267, 0.0
      %vm308 = vcmp.le.f32.partialorder %v267, 15.0
      %vm309 = vmand %vm307, %vm308
      %vm310 = vcmp.ge.f32.partialorder %v268, 0.0
      %vm311 = vmand %vm309, %vm310
      %vm312 = vcmp.le.f32.partialorder %v268, 15.0
      %vm313 = vmand %vm311, %vm312
      %v314 = vsel %vm313, %v306, 0.0
      %v315 = vmax.f32 %v267, 0.0
      %v316 = vmin.f32 %v315, 15.0
      %v317 = vcvt.f32.s32.to.zero.pseudo %v316
      %v318 = vmax.f32 %v268, 0.0
      %v319 = vmin.f32 %v318, 15.0
      %v320 = vcvt.f32.s32.to.zero.pseudo %v319
      %v321 = vmul.u32 %v320, 16
      %v322 = vadd.s32 %v321, %v317
      %v323 = vlaneseq
      %v324 = vshrl.u32 %v323, 7
      %v325 = vsub.s32 0, %v324
      %v326 = vrot.slane %v322, %v325
      %v327 = vlaneseq
      %v328 = vshrl.u32 %v327, 7
      %v329 = vsub.s32 1, %v328
      %v330 = vrot.slane %v322, %v329
      %vm331 = vcmp.eq.s32.totalorder %v272, %v326
      %vm332 = vcmp.eq.s32.totalorder %v272, %v330
      %vm333 = vcmp.eq.s32.totalorder %v273, %v326
      %vm334 = vcmp.eq.s32.totalorder %v273, %v330
      %vm335 = vcmp.eq.s32.totalorder %v274, %v326
      %vm336 = vcmp.eq.s32.totalorder %v274, %v330
      %vm337 = vcmp.eq.s32.totalorder %v275, %v326
      %vm338 = vcmp.eq.s32.totalorder %v275, %v330
      %vm339 = vcmp.eq.s32.totalorder %v276, %v326
      %vm340 = vcmp.eq.s32.totalorder %v276, %v330
      %vm341 = vcmp.eq.s32.totalorder %v277, %v326
      %vm342 = vcmp.eq.s32.totalorder %v277, %v330
      %vm343 = vcmp.eq.s32.totalorder %v278, %v326
      %vm344 = vcmp.eq.s32.totalorder %v278, %v330
      %vm345 = vcmp.eq.s32.totalorder %v279, %v326
      %vm346 = vcmp.eq.s32.totalorder %v279, %v330
      %vm347 = vcmp.eq.s32.totalorder %v280, %v326
      %vm348 = vcmp.eq.s32.totalorder %v280, %v330
      %vm349 = vcmp.eq.s32.totalorder %v281, %v326
      %vm350 = vcmp.eq.s32.totalorder %v281, %v330
      %vm351 = vcmp.eq.s32.totalorder %v282, %v326
      %vm352 = vcmp.eq.s32.totalorder %v282, %v330
      %vm353 = vcmp.eq.s32.totalorder %v283, %v326
      %vm354 = vcmp.eq.s32.totalorder %v283, %v330
      %vm355 = vcmp.eq.s32.totalorder %v284, %v326
      %vm356 = vcmp.eq.s32.totalorder %v284, %v330
      %vm357 = vcmp.eq.s32.totalorder %v285, %v326
      %vm358 = vcmp.eq.s32.totalorder %v285, %v330
      %vm359 = vcmp.eq.s32.totalorder %v286, %v326
      %vm360 = vcmp.eq.s32.totalorder %v286, %v330
      %vm361 = vcmp.eq.s32.totalorder %v287, %v326
      %vm362 = vcmp.eq.s32.totalorder %v287, %v330
      %vm363 = vcmp.eq.s32.totalorder %v288, %v326
      %vm364 = vcmp.eq.s32.totalorder %v288, %v330
      %vm365 = vcmp.eq.s32.totalorder %v289, %v326
      %vm366 = vcmp.eq.s32.totalorder %v289, %v330
      %vm367 = vcmp.eq.s32.totalorder %v290, %v326
      %vm368 = vcmp.eq.s32.totalorder %v290, %v330
      %vm369 = vcmp.eq.s32.totalorder %v291, %v326
      %vm370 = vcmp.eq.s32.totalorder %v291, %v330
      %vm371 = vcmp.eq.s32.totalorder %v292, %v326
      %vm372 = vcmp.eq.s32.totalorder %v292, %v330
      %vm373 = vcmp.eq.s32.totalorder %v293, %v326
      %vm374 = vcmp.eq.s32.totalorder %v293, %v330
      %vm375 = vcmp.eq.s32.totalorder %v294, %v326
      %vm376 = vcmp.eq.s32.totalorder %v294, %v330
      %vm377 = vcmp.eq.s32.totalorder %v295, %v326
      %vm378 = vcmp.eq.s32.totalorder %v295, %v330
      %vm379 = vcmp.eq.s32.totalorder %v296, %v326
      %vm380 = vcmp.eq.s32.totalorder %v296, %v330
      %vm381 = vcmp.eq.s32.totalorder %v297, %v326
      %vm382 = vcmp.eq.s32.totalorder %v297, %v330
      %vm383 = vcmp.eq.s32.totalorder %v298, %v326
      %vm384 = vcmp.eq.s32.totalorder %v298, %v330
      %vm385 = vcmp.eq.s32.totalorder %v299, %v326
      %vm386 = vcmp.eq.s32.totalorder %v299, %v330
      %vm387 = vcmp.eq.s32.totalorder %v300, %v326
      %vm388 = vcmp.eq.s32.totalorder %v300, %v330
      %vm389 = vcmp.eq.s32.totalorder %v301, %v326
      %vm390 = vcmp.eq.s32.totalorder %v301, %v330
      %vm391 = vcmp.eq.s32.totalorder %v302, %v326
      %vm392 = vcmp.eq.s32.totalorder %v302, %v330
      %vm393 = vcmp.eq.s32.totalorder %v303, %v326
      %vm394 = vcmp.eq.s32.totalorder %v303, %v330
      %v396 = vlaneseq
      %v397 = vshrl.u32 %v396, 7
      %v398 = vsub.s32 0, %v397
      %v399 = vrot.slane %v314, %v398
      %v400 = vlaneseq
      %v401 = vshrl.u32 %v400, 7
      %v402 = vsub.s32 1, %v401
      %v403 = vrot.slane %v314, %v402
      %v406 = vsel %vm331, %v399, 0.0
      %v407 = vsel %vm332, %v403, 0.0
      %v408 = vsel %vm333, %v399, 0.0
      %v409 = vsel %vm334, %v403, 0.0
      %v410 = vsel %vm335, %v399, 0.0
      %v411 = vsel %vm336, %v403, 0.0
      %v412 = vsel %vm337, %v399, 0.0
      %v413 = vsel %vm338, %v403, 0.0
      %v414 = vsel %vm339, %v399, 0.0
      %v415 = vsel %vm340, %v403, 0.0
      %v416 = vsel %vm341, %v399, 0.0
      %v417 = vsel %vm342, %v403, 0.0
      %v418 = vsel %vm343, %v399, 0.0
      %v419 = vsel %vm344, %v403, 0.0
      %v420 = vsel %vm345, %v399, 0.0
      %v421 = vsel %vm346, %v403, 0.0
      %v422 = vsel %vm347, %v399, 0.0
      %v423 = vsel %vm348, %v403, 0.0
      %v424 = vsel %vm349, %v399, 0.0
      %v425 = vsel %vm350, %v403, 0.0
      %v426 = vsel %vm351, %v399, 0.0
      %v427 = vsel %vm352, %v403, 0.0
      %v428 = vsel %vm353, %v399, 0.0
      %v429 = vsel %vm354, %v403, 0.0
      %v430 = vsel %vm355, %v399, 0.0
      %v431 = vsel %vm356, %v403, 0.0
      %v432 = vsel %vm357, %v399, 0.0
      %v433 = vsel %vm358, %v403, 0.0
      %v434 = vsel %vm359, %v399, 0.0
      %v435 = vsel %vm360, %v403, 0.0
      %v436 = vsel %vm361, %v399, 0.0
      %v437 = vsel %vm362, %v403, 0.0
      %v438 = vsel %vm363, %v399, 0.0
      %v439 = vsel %vm364, %v403, 0.0
      %v440 = vsel %vm365, %v399, 0.0
      %v441 = vsel %vm366, %v403, 0.0
      %v442 = vsel %vm367, %v399, 0.0
      %v443 = vsel %vm368, %v403, 0.0
      %v444 = vsel %vm369, %v399, 0.0
      %v445 = vsel %vm370, %v403, 0.0
      %v446 = vsel %vm371, %v399, 0.0
      %v447 = vsel %vm372, %v403, 0.0
      %v448 = vsel %vm373, %v399, 0.0
      %v449 = vsel %vm374, %v403, 0.0
      %v450 = vsel %vm375, %v399, 0.0
      %v451 = vsel %vm376, %v403, 0.0
      %v452 = vsel %vm377, %v399, 0.0
      %v453 = vsel %vm378, %v403, 0.0
      %v454 = vsel %vm379, %v399, 0.0
      %v455 = vsel %vm380, %v403, 0.0
      %v456 = vsel %vm381, %v399, 0.0
      %v457 = vsel %vm382, %v403, 0.0
      %v458 = vsel %vm383, %v399, 0.0
      %v459 = vsel %vm384, %v403, 0.0
      %v460 = vsel %vm385, %v399, 0.0
      %v461 = vsel %vm386, %v403, 0.0
      %v462 = vsel %vm387, %v399, 0.0
      %v463 = vsel %vm388, %v403, 0.0
      %v464 = vsel %vm389, %v399, 0.0
      %v465 = vsel %vm390, %v403, 0.0
      %v466 = vsel %vm391, %v399, 0.0
      %v467 = vsel %vm392, %v403, 0.0
      %v468 = vsel %vm393, %v399, 0.0
      %v469 = vsel %vm394, %v403, 0.0
      %v470 = vadd.f32 %v267, 1.0
      %v471 = vmul.f32 %v269, %v305
      %vm472 = vcmp.ge.f32.partialorder %v470, 0.0
      %vm473 = vcmp.le.f32.partialorder %v470, 15.0
      %vm474 = vmand %vm472, %vm473
      %vm475 = vmand %vm474, %vm310
      %vm476 = vmand %vm475, %vm312
      %v477 = vsel %vm476, %v471, 0.0
      %v478 = vmax.f32 %v470, 0.0
      %v479 = vmin.f32 %v478, 15.0
      %v480 = vcvt.f32.s32.to.zero.pseudo %v479
      %v481 = vadd.s32 %v321, %v480
      %v482 = vlaneseq
      %v483 = vshrl.u32 %v482, 7
      %v484 = vsub.s32 0, %v483
      %v485 = vrot.slane %v481, %v484
      %v486 = vlaneseq
      %v487 = vshrl.u32 %v486, 7
      %v488 = vsub.s32 1, %v487
      %v489 = vrot.slane %v481, %v488
      %vm490 = vcmp.eq.s32.totalorder %v272, %v485
      %vm491 = vcmp.eq.s32.totalorder %v272, %v489
      %vm492 = vcmp.eq.s32.totalorder %v273, %v485
      %vm493 = vcmp.eq.s32.totalorder %v273, %v489
      %vm494 = vcmp.eq.s32.totalorder %v274, %v485
      %vm495 = vcmp.eq.s32.totalorder %v274, %v489
      %vm496 = vcmp.eq.s32.totalorder %v275, %v485
      %vm497 = vcmp.eq.s32.totalorder %v275, %v489
      %vm498 = vcmp.eq.s32.totalorder %v276, %v485
      %vm499 = vcmp.eq.s32.totalorder %v276, %v489
      %vm500 = vcmp.eq.s32.totalorder %v277, %v485
      %vm501 = vcmp.eq.s32.totalorder %v277, %v489
      %vm502 = vcmp.eq.s32.totalorder %v278, %v485
      %vm503 = vcmp.eq.s32.totalorder %v278, %v489
      %vm504 = vcmp.eq.s32.totalorder %v279, %v485
      %vm505 = vcmp.eq.s32.totalorder %v279, %v489
      %vm506 = vcmp.eq.s32.totalorder %v280, %v485
      %vm507 = vcmp.eq.s32.totalorder %v280, %v489
      %vm508 = vcmp.eq.s32.totalorder %v281, %v485
      %vm509 = vcmp.eq.s32.totalorder %v281, %v489
      %vm510 = vcmp.eq.s32.totalorder %v282, %v485
      %vm511 = vcmp.eq.s32.totalorder %v282, %v489
      %vm512 = vcmp.eq.s32.totalorder %v283, %v485
      %vm513 = vcmp.eq.s32.totalorder %v283, %v489
      %vm514 = vcmp.eq.s32.totalorder %v284, %v485
      %vm515 = vcmp.eq.s32.totalorder %v284, %v489
      %vm516 = vcmp.eq.s32.totalorder %v285, %v485
      %vm517 = vcmp.eq.s32.totalorder %v285, %v489
      %vm518 = vcmp.eq.s32.totalorder %v286, %v485
      %vm519 = vcmp.eq.s32.totalorder %v286, %v489
      %vm520 = vcmp.eq.s32.totalorder %v287, %v485
      %vm521 = vcmp.eq.s32.totalorder %v287, %v489
      %vm522 = vcmp.eq.s32.totalorder %v288, %v485
      %vm523 = vcmp.eq.s32.totalorder %v288, %v489
      %vm524 = vcmp.eq.s32.totalorder %v289, %v485
      %vm525 = vcmp.eq.s32.totalorder %v289, %v489
      %vm526 = vcmp.eq.s32.totalorder %v290, %v485
      %vm527 = vcmp.eq.s32.totalorder %v290, %v489
      %vm528 = vcmp.eq.s32.totalorder %v291, %v485
      %vm529 = vcmp.eq.s32.totalorder %v291, %v489
      %vm530 = vcmp.eq.s32.totalorder %v292, %v485
      %vm531 = vcmp.eq.s32.totalorder %v292, %v489
      %vm532 = vcmp.eq.s32.totalorder %v293, %v485
      %vm533 = vcmp.eq.s32.totalorder %v293, %v489
      %vm534 = vcmp.eq.s32.totalorder %v294, %v485
      %vm535 = vcmp.eq.s32.totalorder %v294, %v489
      %vm536 = vcmp.eq.s32.totalorder %v295, %v485
      %vm537 = vcmp.eq.s32.totalorder %v295, %v489
      %vm538 = vcmp.eq.s32.totalorder %v296, %v485
      %vm539 = vcmp.eq.s32.totalorder %v296, %v489
      %vm540 = vcmp.eq.s32.totalorder %v297, %v485
      %vm541 = vcmp.eq.s32.totalorder %v297, %v489
      %vm542 = vcmp.eq.s32.totalorder %v298, %v485
      %vm543 = vcmp.eq.s32.totalorder %v298, %v489
      %vm544 = vcmp.eq.s32.totalorder %v299, %v485
      %vm545 = vcmp.eq.s32.totalorder %v299, %v489
      %vm546 = vcmp.eq.s32.totalorder %v300, %v485
      %vm547 = vcmp.eq.s32.totalorder %v300, %v489
      %vm548 = vcmp.eq.s32.totalorder %v301, %v485
      %vm549 = vcmp.eq.s32.totalorder %v301, %v489
      %vm550 = vcmp.eq.s32.totalorder %v302, %v485
      %vm551 = vcmp.eq.s32.totalorder %v302, %v489
      %vm552 = vcmp.eq.s32.totalorder %v303, %v485
      %vm553 = vcmp.eq.s32.totalorder %v303, %v489
      %v555 = vlaneseq
      %v556 = vshrl.u32 %v555, 7
      %v557 = vsub.s32 0, %v556
      %v558 = vrot.slane %v477, %v557
      %v559 = vlaneseq
      %v560 = vshrl.u32 %v559, 7
      %v561 = vsub.s32 1, %v560
      %v562 = vrot.slane %v477, %v561
      %v565 = vsel %vm490, %v558, 0.0
      %v566 = vsel %vm491, %v562, 0.0
      %v567 = vsel %vm492, %v558, 0.0
      %v568 = vsel %vm493, %v562, 0.0
      %v569 = vsel %vm494, %v558, 0.0
      %v570 = vsel %vm495, %v562, 0.0
      %v571 = vsel %vm496, %v558, 0.0
      %v572 = vsel %vm497, %v562, 0.0
      %v573 = vsel %vm498, %v558, 0.0
      %v574 = vsel %vm499, %v562, 0.0
      %v575 = vsel %vm500, %v558, 0.0
      %v576 = vsel %vm501, %v562, 0.0
      %v577 = vsel %vm502, %v558, 0.0
      %v578 = vsel %vm503, %v562, 0.0
      %v579 = vsel %vm504, %v558, 0.0
      %v580 = vsel %vm505, %v562, 0.0
      %v581 = vsel %vm506, %v558, 0.0
      %v582 = vsel %vm507, %v562, 0.0
      %v583 = vsel %vm508, %v558, 0.0
      %v584 = vsel %vm509, %v562, 0.0
      %v585 = vsel %vm510, %v558, 0.0
      %v586 = vsel %vm511, %v562, 0.0
      %v587 = vsel %vm512, %v558, 0.0
      %v588 = vsel %vm513, %v562, 0.0
      %v589 = vsel %vm514, %v558, 0.0
      %v590 = vsel %vm515, %v562, 0.0
      %v591 = vsel %vm516, %v558, 0.0
      %v592 = vsel %vm517, %v562, 0.0
      %v593 = vsel %vm518, %v558, 0.0
      %v594 = vsel %vm519, %v562, 0.0
      %v595 = vsel %vm520, %v558, 0.0
      %v596 = vsel %vm521, %v562, 0.0
      %v597 = vsel %vm522, %v558, 0.0
      %v598 = vsel %vm523, %v562, 0.0
      %v599 = vsel %vm524, %v558, 0.0
      %v600 = vsel %vm525, %v562, 0.0
      %v601 = vsel %vm526, %v558, 0.0
      %v602 = vsel %vm527, %v562, 0.0
      %v603 = vsel %vm528, %v558, 0.0
      %v604 = vsel %vm529, %v562, 0.0
      %v605 = vsel %vm530, %v558, 0.0
      %v606 = vsel %vm531, %v562, 0.0
      %v607 = vsel %vm532, %v558, 0.0
      %v608 = vsel %vm533, %v562, 0.0
      %v609 = vsel %vm534, %v558, 0.0
      %v610 = vsel %vm535, %v562, 0.0
      %v611 = vsel %vm536, %v558, 0.0
      %v612 = vsel %vm537, %v562, 0.0
      %v613 = vsel %vm538, %v558, 0.0
      %v614 = vsel %vm539, %v562, 0.0
      %v615 = vsel %vm540, %v558, 0.0
      %v616 = vsel %vm541, %v562, 0.0
      %v617 = vsel %vm542, %v558, 0.0
      %v618 = vsel %vm543, %v562, 0.0
      %v619 = vsel %vm544, %v558, 0.0
      %v620 = vsel %vm545, %v562, 0.0
      %v621 = vsel %vm546, %v558, 0.0
      %v622 = vsel %vm547, %v562, 0.0
      %v623 = vsel %vm548, %v558, 0.0
      %v624 = vsel %vm549, %v562, 0.0
      %v625 = vsel %vm550, %v558, 0.0
      %v626 = vsel %vm551, %v562, 0.0
      %v627 = vsel %vm552, %v558, 0.0
      %v628 = vsel %vm553, %v562, 0.0
      %v629 = vadd.f32 %v406, %v565
      %v630 = vadd.f32 %v407, %v566
      %v631 = vadd.f32 %v408, %v567
      %v632 = vadd.f32 %v409, %v568
      %v633 = vadd.f32 %v410, %v569
      %v634 = vadd.f32 %v411, %v570
      %v635 = vadd.f32 %v412, %v571
      %v636 = vadd.f32 %v413, %v572
      %v637 = vadd.f32 %v414, %v573
      %v638 = vadd.f32 %v415, %v574
      %v639 = vadd.f32 %v416, %v575
      %v640 = vadd.f32 %v417, %v576
      %v641 = vadd.f32 %v418, %v577
      %v642 = vadd.f32 %v419, %v578
      %v643 = vadd.f32 %v420, %v579
      %v644 = vadd.f32 %v421, %v580
      %v645 = vadd.f32 %v422, %v581
      %v646 = vadd.f32 %v423, %v582
      %v647 = vadd.f32 %v424, %v583
      %v648 = vadd.f32 %v425, %v584
      %v649 = vadd.f32 %v426, %v585
      %v650 = vadd.f32 %v427, %v586
      %v651 = vadd.f32 %v428, %v587
      %v652 = vadd.f32 %v429, %v588
      %v653 = vadd.f32 %v430, %v589
      %v654 = vadd.f32 %v431, %v590
      %v655 = vadd.f32 %v432, %v591
      %v656 = vadd.f32 %v433, %v592
      %v657 = vadd.f32 %v434, %v593
      %v658 = vadd.f32 %v435, %v594
      %v659 = vadd.f32 %v436, %v595
      %v660 = vadd.f32 %v437, %v596
      %v661 = vadd.f32 %v438, %v597
      %v662 = vadd.f32 %v439, %v598
      %v663 = vadd.f32 %v440, %v599
      %v664 = vadd.f32 %v441, %v600
      %v665 = vadd.f32 %v442, %v601
      %v666 = vadd.f32 %v443, %v602
      %v667 = vadd.f32 %v444, %v603
      %v668 = vadd.f32 %v445, %v604
      %v669 = vadd.f32 %v446, %v605
      %v670 = vadd.f32 %v447, %v606
      %v671 = vadd.f32 %v448, %v607
      %v672 = vadd.f32 %v449, %v608
      %v673 = vadd.f32 %v450, %v609
      %v674 = vadd.f32 %v451, %v610
      %v675 = vadd.f32 %v452, %v611
      %v676 = vadd.f32 %v453, %v612
      %v677 = vadd.f32 %v454, %v613
      %v678 = vadd.f32 %v455, %v614
      %v679 = vadd.f32 %v456, %v615
      %v680 = vadd.f32 %v457, %v616
      %v681 = vadd.f32 %v458, %v617
      %v682 = vadd.f32 %v459, %v618
      %v683 = vadd.f32 %v460, %v619
      %v684 = vadd.f32 %v461, %v620
      %v685 = vadd.f32 %v462, %v621
      %v686 = vadd.f32 %v463, %v622
      %v687 = vadd.f32 %v464, %v623
      %v688 = vadd.f32 %v465, %v624
      %v689 = vadd.f32 %v466, %v625
      %v690 = vadd.f32 %v467, %v626
      %v691 = vadd.f32 %v468, %v627
      %v692 = vadd.f32 %v469, %v628
      %v693 = vadd.f32 %v268, 1.0
      %v694 = vmul.f32 %v304, %v270
      %vm695 = vcmp.ge.f32.partialorder %v693, 0.0
      %vm696 = vmand %vm309, %vm695
      %vm697 = vcmp.le.f32.partialorder %v693, 15.0
      %vm698 = vmand %vm696, %vm697
      %v699 = vsel %vm698, %v694, 0.0
      %v700 = vmax.f32 %v693, 0.0
      %v701 = vmin.f32 %v700, 15.0
      %v702 = vcvt.f32.s32.to.zero.pseudo %v701
      %v703 = vmul.u32 %v702, 16
      %v704 = vadd.s32 %v703, %v317
      %v705 = vlaneseq
      %v706 = vshrl.u32 %v705, 7
      %v707 = vsub.s32 0, %v706
      %v708 = vrot.slane %v704, %v707
      %v709 = vlaneseq
      %v710 = vshrl.u32 %v709, 7
      %v711 = vsub.s32 1, %v710
      %v712 = vrot.slane %v704, %v711
      %vm713 = vcmp.eq.s32.totalorder %v272, %v708
      %vm714 = vcmp.eq.s32.totalorder %v272, %v712
      %vm715 = vcmp.eq.s32.totalorder %v273, %v708
      %vm716 = vcmp.eq.s32.totalorder %v273, %v712
      %vm717 = vcmp.eq.s32.totalorder %v274, %v708
      %vm718 = vcmp.eq.s32.totalorder %v274, %v712
      %vm719 = vcmp.eq.s32.totalorder %v275, %v708
      %vm720 = vcmp.eq.s32.totalorder %v275, %v712
      %vm721 = vcmp.eq.s32.totalorder %v276, %v708
      %vm722 = vcmp.eq.s32.totalorder %v276, %v712
      %vm723 = vcmp.eq.s32.totalorder %v277, %v708
      %vm724 = vcmp.eq.s32.totalorder %v277, %v712
      %vm725 = vcmp.eq.s32.totalorder %v278, %v708
      %vm726 = vcmp.eq.s32.totalorder %v278, %v712
      %vm727 = vcmp.eq.s32.totalorder %v279, %v708
      %vm728 = vcmp.eq.s32.totalorder %v279, %v712
      %vm729 = vcmp.eq.s32.totalorder %v280, %v708
      %vm730 = vcmp.eq.s32.totalorder %v280, %v712
      %vm731 = vcmp.eq.s32.totalorder %v281, %v708
      %vm732 = vcmp.eq.s32.totalorder %v281, %v712
      %vm733 = vcmp.eq.s32.totalorder %v282, %v708
      %vm734 = vcmp.eq.s32.totalorder %v282, %v712
      %vm735 = vcmp.eq.s32.totalorder %v283, %v708
      %vm736 = vcmp.eq.s32.totalorder %v283, %v712
      %vm737 = vcmp.eq.s32.totalorder %v284, %v708
      %vm738 = vcmp.eq.s32.totalorder %v284, %v712
      %vm739 = vcmp.eq.s32.totalorder %v285, %v708
      %vm740 = vcmp.eq.s32.totalorder %v285, %v712
      %vm741 = vcmp.eq.s32.totalorder %v286, %v708
      %vm742 = vcmp.eq.s32.totalorder %v286, %v712
      %vm743 = vcmp.eq.s32.totalorder %v287, %v708
      %vm744 = vcmp.eq.s32.totalorder %v287, %v712
      %vm745 = vcmp.eq.s32.totalorder %v288, %v708
      %vm746 = vcmp.eq.s32.totalorder %v288, %v712
      %vm747 = vcmp.eq.s32.totalorder %v289, %v708
      %vm748 = vcmp.eq.s32.totalorder %v289, %v712
      %vm749 = vcmp.eq.s32.totalorder %v290, %v708
      %vm750 = vcmp.eq.s32.totalorder %v290, %v712
      %vm751 = vcmp.eq.s32.totalorder %v291, %v708
      %vm752 = vcmp.eq.s32.totalorder %v291, %v712
      %vm753 = vcmp.eq.s32.totalorder %v292, %v708
      %vm754 = vcmp.eq.s32.totalorder %v292, %v712
      %vm755 = vcmp.eq.s32.totalorder %v293, %v708
      %vm756 = vcmp.eq.s32.totalorder %v293, %v712
      %vm757 = vcmp.eq.s32.totalorder %v294, %v708
      %vm758 = vcmp.eq.s32.totalorder %v294, %v712
      %vm759 = vcmp.eq.s32.totalorder %v295, %v708
      %vm760 = vcmp.eq.s32.totalorder %v295, %v712
      %vm761 = vcmp.eq.s32.totalorder %v296, %v708
      %vm762 = vcmp.eq.s32.totalorder %v296, %v712
      %vm763 = vcmp.eq.s32.totalorder %v297, %v708
      %vm764 = vcmp.eq.s32.totalorder %v297, %v712
      %vm765 = vcmp.eq.s32.totalorder %v298, %v708
      %vm766 = vcmp.eq.s32.totalorder %v298, %v712
      %vm767 = vcmp.eq.s32.totalorder %v299, %v708
      %vm768 = vcmp.eq.s32.totalorder %v299, %v712
      %vm769 = vcmp.eq.s32.totalorder %v300, %v708
      %vm770 = vcmp.eq.s32.totalorder %v300, %v712
      %vm771 = vcmp.eq.s32.totalorder %v301, %v708
      %vm772 = vcmp.eq.s32.totalorder %v301, %v712
      %vm773 = vcmp.eq.s32.totalorder %v302, %v708
      %vm774 = vcmp.eq.s32.totalorder %v302, %v712
      %vm775 = vcmp.eq.s32.totalorder %v303, %v708
      %vm776 = vcmp.eq.s32.totalorder %v303, %v712
      %v778 = vlaneseq
      %v779 = vshrl.u32 %v778, 7
      %v780 = vsub.s32 0, %v779
      %v781 = vrot.slane %v699, %v780
      %v782 = vlaneseq
      %v783 = vshrl.u32 %v782, 7
      %v784 = vsub.s32 1, %v783
      %v785 = vrot.slane %v699, %v784
      %v788 = vsel %vm713, %v781, 0.0
      %v789 = vsel %vm714, %v785, 0.0
      %v790 = vsel %vm715, %v781, 0.0
      %v791 = vsel %vm716, %v785, 0.0
      %v792 = vsel %vm717, %v781, 0.0
      %v793 = vsel %vm718, %v785, 0.0
      %v794 = vsel %vm719, %v781, 0.0
      %v795 = vsel %vm720, %v785, 0.0
      %v796 = vsel %vm721, %v781, 0.0
      %v797 = vsel %vm722, %v785, 0.0
      %v798 = vsel %vm723, %v781, 0.0
      %v799 = vsel %vm724, %v785, 0.0
      %v800 = vsel %vm725, %v781, 0.0
      %v801 = vsel %vm726, %v785, 0.0
      %v802 = vsel %vm727, %v781, 0.0
      %v803 = vsel %vm728, %v785, 0.0
      %v804 = vsel %vm729, %v781, 0.0
      %v805 = vsel %vm730, %v785, 0.0
      %v806 = vsel %vm731, %v781, 0.0
      %v807 = vsel %vm732, %v785, 0.0
      %v808 = vsel %vm733, %v781, 0.0
      %v809 = vsel %vm734, %v785, 0.0
      %v810 = vsel %vm735, %v781, 0.0
      %v811 = vsel %vm736, %v785, 0.0
      %v812 = vsel %vm737, %v781, 0.0
      %v813 = vsel %vm738, %v785, 0.0
      %v814 = vsel %vm739, %v781, 0.0
      %v815 = vsel %vm740, %v785, 0.0
      %v816 = vsel %vm741, %v781, 0.0
      %v817 = vsel %vm742, %v785, 0.0
      %v818 = vsel %vm743, %v781, 0.0
      %v819 = vsel %vm744, %v785, 0.0
      %v820 = vsel %vm745, %v781, 0.0
      %v821 = vsel %vm746, %v785, 0.0
      %v822 = vsel %vm747, %v781, 0.0
      %v823 = vsel %vm748, %v785, 0.0
      %v824 = vsel %vm749, %v781, 0.0
      %v825 = vsel %vm750, %v785, 0.0
      %v826 = vsel %vm751, %v781, 0.0
      %v827 = vsel %vm752, %v785, 0.0
      %v828 = vsel %vm753, %v781, 0.0
      %v829 = vsel %vm754, %v785, 0.0
      %v830 = vsel %vm755, %v781, 0.0
      %v831 = vsel %vm756, %v785, 0.0
      %v832 = vsel %vm757, %v781, 0.0
      %v833 = vsel %vm758, %v785, 0.0
      %v834 = vsel %vm759, %v781, 0.0
      %v835 = vsel %vm760, %v785, 0.0
      %v836 = vsel %vm761, %v781, 0.0
      %v837 = vsel %vm762, %v785, 0.0
      %v838 = vsel %vm763, %v781, 0.0
      %v839 = vsel %vm764, %v785, 0.0
      %v840 = vsel %vm765, %v781, 0.0
      %v841 = vsel %vm766, %v785, 0.0
      %v842 = vsel %vm767, %v781, 0.0
      %v843 = vsel %vm768, %v785, 0.0
      %v844 = vsel %vm769, %v781, 0.0
      %v845 = vsel %vm770, %v785, 0.0
      %v846 = vsel %vm771, %v781, 0.0
      %v847 = vsel %vm772, %v785, 0.0
      %v848 = vsel %vm773, %v781, 0.0
      %v849 = vsel %vm774, %v785, 0.0
      %v850 = vsel %vm775, %v781, 0.0
      %v851 = vsel %vm776, %v785, 0.0
      %v852 = vadd.f32 %v629, %v788
      %v853 = vadd.f32 %v630, %v789
      %v854 = vadd.f32 %v631, %v790
      %v855 = vadd.f32 %v632, %v791
      %v856 = vadd.f32 %v633, %v792
      %v857 = vadd.f32 %v634, %v793
      %v858 = vadd.f32 %v635, %v794
      %v859 = vadd.f32 %v636, %v795
      %v860 = vadd.f32 %v637, %v796
      %v861 = vadd.f32 %v638, %v797
      %v862 = vadd.f32 %v639, %v798
      %v863 = vadd.f32 %v640, %v799
      %v864 = vadd.f32 %v641, %v800
      %v865 = vadd.f32 %v642, %v801
      %v866 = vadd.f32 %v643, %v802
      %v867 = vadd.f32 %v644, %v803
      %v868 = vadd.f32 %v645, %v804
      %v869 = vadd.f32 %v646, %v805
      %v870 = vadd.f32 %v647, %v806
      %v871 = vadd.f32 %v648, %v807
      %v872 = vadd.f32 %v649, %v808
      %v873 = vadd.f32 %v650, %v809
      %v874 = vadd.f32 %v651, %v810
      %v875 = vadd.f32 %v652, %v811
      %v876 = vadd.f32 %v653, %v812
      %v877 = vadd.f32 %v654, %v813
      %v878 = vadd.f32 %v655, %v814
      %v879 = vadd.f32 %v656, %v815
      %v880 = vadd.f32 %v657, %v816
      %v881 = vadd.f32 %v658, %v817
      %v882 = vadd.f32 %v659, %v818
      %v883 = vadd.f32 %v660, %v819
      %v884 = vadd.f32 %v661, %v820
      %v885 = vadd.f32 %v662, %v821
      %v886 = vadd.f32 %v663, %v822
      %v887 = vadd.f32 %v664, %v823
      %v888 = vadd.f32 %v665, %v824
      %v889 = vadd.f32 %v666, %v825
      %v890 = vadd.f32 %v667, %v826
      %v891 = vadd.f32 %v668, %v827
      %v892 = vadd.f32 %v669, %v828
      %v893 = vadd.f32 %v670, %v829
      %v894 = vadd.f32 %v671, %v830
      %v895 = vadd.f32 %v672, %v831
      %v896 = vadd.f32 %v673, %v832
      %v897 = vadd.f32 %v674, %v833
      %v898 = vadd.f32 %v675, %v834
      %v899 = vadd.f32 %v676, %v835
      %v900 = vadd.f32 %v677, %v836
      %v901 = vadd.f32 %v678, %v837
      %v902 = vadd.f32 %v679, %v838
      %v903 = vadd.f32 %v680, %v839
      %v904 = vadd.f32 %v681, %v840
      %v905 = vadd.f32 %v682, %v841
      %v906 = vadd.f32 %v683, %v842
      %v907 = vadd.f32 %v684, %v843
      %v908 = vadd.f32 %v685, %v844
      %v909 = vadd.f32 %v686, %v845
      %v910 = vadd.f32 %v687, %v846
      %v911 = vadd.f32 %v688, %v847
      %v912 = vadd.f32 %v689, %v848
      %v913 = vadd.f32 %v690, %v849
      %v914 = vadd.f32 %v691, %v850
      %v915 = vadd.f32 %v692, %v851
      %v916 = vmul.f32 %v269, %v270
      %vm917 = vmand %vm474, %vm695
      %vm918 = vmand %vm917, %vm697
      %v919 = vsel %vm918, %v916, 0.0
      %v920 = vadd.s32 %v703, %v480
      %v921 = vlaneseq
      %v922 = vshrl.u32 %v921, 7
      %v923 = vsub.s32 0, %v922
      %v924 = vrot.slane %v920, %v923
      %v925 = vlaneseq
      %v926 = vshrl.u32 %v925, 7
      %v927 = vsub.s32 1, %v926
      %v928 = vrot.slane %v920, %v927
      %vm929 = vcmp.eq.s32.totalorder %v272, %v924
      %vm930 = vcmp.eq.s32.totalorder %v272, %v928
      %vm931 = vcmp.eq.s32.totalorder %v273, %v924
      %vm932 = vcmp.eq.s32.totalorder %v273, %v928
      %vm933 = vcmp.eq.s32.totalorder %v274, %v924
      %vm934 = vcmp.eq.s32.totalorder %v274, %v928
      %vm935 = vcmp.eq.s32.totalorder %v275, %v924
      %vm936 = vcmp.eq.s32.totalorder %v275, %v928
      %vm937 = vcmp.eq.s32.totalorder %v276, %v924
      %vm938 = vcmp.eq.s32.totalorder %v276, %v928
      %vm939 = vcmp.eq.s32.totalorder %v277, %v924
      %vm940 = vcmp.eq.s32.totalorder %v277, %v928
      %vm941 = vcmp.eq.s32.totalorder %v278, %v924
      %vm942 = vcmp.eq.s32.totalorder %v278, %v928
      %vm943 = vcmp.eq.s32.totalorder %v279, %v924
      %vm944 = vcmp.eq.s32.totalorder %v279, %v928
      %vm945 = vcmp.eq.s32.totalorder %v280, %v924
      %vm946 = vcmp.eq.s32.totalorder %v280, %v928
      %vm947 = vcmp.eq.s32.totalorder %v281, %v924
      %vm948 = vcmp.eq.s32.totalorder %v281, %v928
      %vm949 = vcmp.eq.s32.totalorder %v282, %v924
      %vm950 = vcmp.eq.s32.totalorder %v282, %v928
      %vm951 = vcmp.eq.s32.totalorder %v283, %v924
      %vm952 = vcmp.eq.s32.totalorder %v283, %v928
      %vm953 = vcmp.eq.s32.totalorder %v284, %v924
      %vm954 = vcmp.eq.s32.totalorder %v284, %v928
      %vm955 = vcmp.eq.s32.totalorder %v285, %v924
      %vm956 = vcmp.eq.s32.totalorder %v285, %v928
      %vm957 = vcmp.eq.s32.totalorder %v286, %v924
      %vm958 = vcmp.eq.s32.totalorder %v286, %v928
      %vm959 = vcmp.eq.s32.totalorder %v287, %v924
      %vm960 = vcmp.eq.s32.totalorder %v287, %v928
      %vm961 = vcmp.eq.s32.totalorder %v288, %v924
      %vm962 = vcmp.eq.s32.totalorder %v288, %v928
      %vm963 = vcmp.eq.s32.totalorder %v289, %v924
      %vm964 = vcmp.eq.s32.totalorder %v289, %v928
      %vm965 = vcmp.eq.s32.totalorder %v290, %v924
      %vm966 = vcmp.eq.s32.totalorder %v290, %v928
      %vm967 = vcmp.eq.s32.totalorder %v291, %v924
      %vm968 = vcmp.eq.s32.totalorder %v291, %v928
      %vm969 = vcmp.eq.s32.totalorder %v292, %v924
      %vm970 = vcmp.eq.s32.totalorder %v292, %v928
      %vm971 = vcmp.eq.s32.totalorder %v293, %v924
      %vm972 = vcmp.eq.s32.totalorder %v293, %v928
      %vm973 = vcmp.eq.s32.totalorder %v294, %v924
      %vm974 = vcmp.eq.s32.totalorder %v294, %v928
      %vm975 = vcmp.eq.s32.totalorder %v295, %v924
      %vm976 = vcmp.eq.s32.totalorder %v295, %v928
      %vm977 = vcmp.eq.s32.totalorder %v296, %v924
      %vm978 = vcmp.eq.s32.totalorder %v296, %v928
      %vm979 = vcmp.eq.s32.totalorder %v297, %v924
      %vm980 = vcmp.eq.s32.totalorder %v297, %v928
      %vm981 = vcmp.eq.s32.totalorder %v298, %v924
      %vm982 = vcmp.eq.s32.totalorder %v298, %v928
      %vm983 = vcmp.eq.s32.totalorder %v299, %v924
      %vm984 = vcmp.eq.s32.totalorder %v299, %v928
      %vm985 = vcmp.eq.s32.totalorder %v300, %v924
      %vm986 = vcmp.eq.s32.totalorder %v300, %v928
      %vm987 = vcmp.eq.s32.totalorder %v301, %v924
      %vm988 = vcmp.eq.s32.totalorder %v301, %v928
      %vm989 = vcmp.eq.s32.totalorder %v302, %v924
      %vm990 = vcmp.eq.s32.totalorder %v302, %v928
      %vm991 = vcmp.eq.s32.totalorder %v303, %v924
      %vm992 = vcmp.eq.s32.totalorder %v303, %v928
      %v994 = vlaneseq
      %v995 = vshrl.u32 %v994, 7
      %v996 = vsub.s32 0, %v995
      %v997 = vrot.slane %v919, %v996
      %v998 = vlaneseq
      %v999 = vshrl.u32 %v998, 7
      %v1000 = vsub.s32 1, %v999
      %v1001 = vrot.slane %v919, %v1000
      %v1004 = vsel %vm929, %v997, 0.0
      %v1005 = vsel %vm930, %v1001, 0.0
      %v1006 = vsel %vm931, %v997, 0.0
      %v1007 = vsel %vm932, %v1001, 0.0
      %v1008 = vsel %vm933, %v997, 0.0
      %v1009 = vsel %vm934, %v1001, 0.0
      %v1010 = vsel %vm935, %v997, 0.0
      %v1011 = vsel %vm936, %v1001, 0.0
      %v1012 = vsel %vm937, %v997, 0.0
      %v1013 = vsel %vm938, %v1001, 0.0
      %v1014 = vsel %vm939, %v997, 0.0
      %v1015 = vsel %vm940, %v1001, 0.0
      %v1016 = vsel %vm941, %v997, 0.0
      %v1017 = vsel %vm942, %v1001, 0.0
      %v1018 = vsel %vm943, %v997, 0.0
      %v1019 = vsel %vm944, %v1001, 0.0
      %v1020 = vsel %vm945, %v997, 0.0
      %v1021 = vsel %vm946, %v1001, 0.0
      %v1022 = vsel %vm947, %v997, 0.0
      %v1023 = vsel %vm948, %v1001, 0.0
      %v1024 = vsel %vm949, %v997, 0.0
      %v1025 = vsel %vm950, %v1001, 0.0
      %v1026 = vsel %vm951, %v997, 0.0
      %v1027 = vsel %vm952, %v1001, 0.0
      %v1028 = vsel %vm953, %v997, 0.0
      %v1029 = vsel %vm954, %v1001, 0.0
      %v1030 = vsel %vm955, %v997, 0.0
      %v1031 = vsel %vm956, %v1001, 0.0
      %v1032 = vsel %vm957, %v997, 0.0
      %v1033 = vsel %vm958, %v1001, 0.0
      %v1034 = vsel %vm959, %v997, 0.0
      %v1035 = vsel %vm960, %v1001, 0.0
      %v1036 = vsel %vm961, %v997, 0.0
      %v1037 = vsel %vm962, %v1001, 0.0
      %v1038 = vsel %vm963, %v997, 0.0
      %v1039 = vsel %vm964, %v1001, 0.0
      %v1040 = vsel %vm965, %v997, 0.0
      %v1041 = vsel %vm966, %v1001, 0.0
      %v1042 = vsel %vm967, %v997, 0.0
      %v1043 = vsel %vm968, %v1001, 0.0
      %v1044 = vsel %vm969, %v997, 0.0
      %v1045 = vsel %vm970, %v1001, 0.0
      %v1046 = vsel %vm971, %v997, 0.0
      %v1047 = vsel %vm972, %v1001, 0.0
      %v1048 = vsel %vm973, %v997, 0.0
      %v1049 = vsel %vm974, %v1001, 0.0
      %v1050 = vsel %vm975, %v997, 0.0
      %v1051 = vsel %vm976, %v1001, 0.0
      %v1052 = vsel %vm977, %v997, 0.0
      %v1053 = vsel %vm978, %v1001, 0.0
      %v1054 = vsel %vm979, %v997, 0.0
      %v1055 = vsel %vm980, %v1001, 0.0
      %v1056 = vsel %vm981, %v997, 0.0
      %v1057 = vsel %vm982, %v1001, 0.0
      %v1058 = vsel %vm983, %v997, 0.0
      %v1059 = vsel %vm984, %v1001, 0.0
      %v1060 = vsel %vm985, %v997, 0.0
      %v1061 = vsel %vm986, %v1001, 0.0
      %v1062 = vsel %vm987, %v997, 0.0
      %v1063 = vsel %vm988, %v1001, 0.0
      %v1064 = vsel %vm989, %v997, 0.0
      %v1065 = vsel %vm990, %v1001, 0.0
      %v1066 = vsel %vm991, %v997, 0.0
      %v1067 = vsel %vm992, %v1001, 0.0
      %v1068 = vadd.f32 %v852, %v1004
      %v1069 = vadd.f32 %v853, %v1005
      %v1070 = vadd.f32 %v854, %v1006
      %v1071 = vadd.f32 %v855, %v1007
      %v1072 = vadd.f32 %v856, %v1008
      %v1073 = vadd.f32 %v857, %v1009
      %v1074 = vadd.f32 %v858, %v1010
      %v1075 = vadd.f32 %v859, %v1011
      %v1076 = vadd.f32 %v860, %v1012
      %v1077 = vadd.f32 %v861, %v1013
      %v1078 = vadd.f32 %v862, %v1014
      %v1079 = vadd.f32 %v863, %v1015
      %v1080 = vadd.f32 %v864, %v1016
      %v1081 = vadd.f32 %v865, %v1017
      %v1082 = vadd.f32 %v866, %v1018
      %v1083 = vadd.f32 %v867, %v1019
      %v1084 = vadd.f32 %v868, %v1020
      %v1085 = vadd.f32 %v869, %v1021
      %v1086 = vadd.f32 %v870, %v1022
      %v1087 = vadd.f32 %v871, %v1023
      %v1088 = vadd.f32 %v872, %v1024
      %v1089 = vadd.f32 %v873, %v1025
      %v1090 = vadd.f32 %v874, %v1026
      %v1091 = vadd.f32 %v875, %v1027
      %v1092 = vadd.f32 %v876, %v1028
      %v1093 = vadd.f32 %v877, %v1029
      %v1094 = vadd.f32 %v878, %v1030
      %v1095 = vadd.f32 %v879, %v1031
      %v1096 = vadd.f32 %v880, %v1032
      %v1097 = vadd.f32 %v881, %v1033
      %v1098 = vadd.f32 %v882, %v1034
      %v1099 = vadd.f32 %v883, %v1035
      %v1100 = vadd.f32 %v884, %v1036
      %v1101 = vadd.f32 %v885, %v1037
      %v1102 = vadd.f32 %v886, %v1038
      %v1103 = vadd.f32 %v887, %v1039
      %v1104 = vadd.f32 %v888, %v1040
      %v1105 = vadd.f32 %v889, %v1041
      %v1106 = vadd.f32 %v890, %v1042
      %v1107 = vadd.f32 %v891, %v1043
      %v1108 = vadd.f32 %v892, %v1044
      %v1109 = vadd.f32 %v893, %v1045
      %v1110 = vadd.f32 %v894, %v1046
      %v1111 = vadd.f32 %v895, %v1047
      %v1112 = vadd.f32 %v896, %v1048
      %v1113 = vadd.f32 %v897, %v1049
      %v1114 = vadd.f32 %v898, %v1050
      %v1115 = vadd.f32 %v899, %v1051
      %v1116 = vadd.f32 %v900, %v1052
      %v1117 = vadd.f32 %v901, %v1053
      %v1118 = vadd.f32 %v902, %v1054
      %v1119 = vadd.f32 %v903, %v1055
      %v1120 = vadd.f32 %v904, %v1056
      %v1121 = vadd.f32 %v905, %v1057
      %v1122 = vadd.f32 %v906, %v1058
      %v1123 = vadd.f32 %v907, %v1059
      %v1124 = vadd.f32 %v908, %v1060
      %v1125 = vadd.f32 %v909, %v1061
      %v1126 = vadd.f32 %v910, %v1062
      %v1127 = vadd.f32 %v911, %v1063
      %v1128 = vadd.f32 %v912, %v1064
      %v1129 = vadd.f32 %v913, %v1065
      %v1130 = vadd.f32 %v914, %v1066
      %v1131 = vadd.f32 %v915, %v1067
      %v1132 = vld [vmem:[%s228] sm:$0x77]
      %v1133 = vpack.c.bf16 %v1070, %v1068
      %v1134 = vpack.c.bf16 %v1071, %v1069
      %v1135 = vpack.c.bf16 %v1074, %v1072
      %v1136 = vpack.c.bf16 %v1075, %v1073
      %v1137 = vpack.c.bf16 %v1078, %v1076
      %v1138 = vpack.c.bf16 %v1079, %v1077
      %v1139 = vpack.c.bf16 %v1082, %v1080
      %v1140 = vpack.c.bf16 %v1083, %v1081
      %v1141 = vpack.c.bf16 %v1086, %v1084
      %v1142 = vpack.c.bf16 %v1087, %v1085
      %v1143 = vpack.c.bf16 %v1090, %v1088
      %v1144 = vpack.c.bf16 %v1091, %v1089
      %v1145 = vpack.c.bf16 %v1094, %v1092
      %v1146 = vpack.c.bf16 %v1095, %v1093
      %v1147 = vpack.c.bf16 %v1098, %v1096
      %v1148 = vpack.c.bf16 %v1099, %v1097
      %v1149 = vpack.c.bf16 %v1102, %v1100
      %v1150 = vpack.c.bf16 %v1103, %v1101
      %v1151 = vpack.c.bf16 %v1106, %v1104
      %v1152 = vpack.c.bf16 %v1107, %v1105
      %v1153 = vpack.c.bf16 %v1110, %v1108
      %v1154 = vpack.c.bf16 %v1111, %v1109
      %v1155 = vpack.c.bf16 %v1114, %v1112
      %v1156 = vpack.c.bf16 %v1115, %v1113
      %v1157 = vpack.c.bf16 %v1118, %v1116
      %v1158 = vpack.c.bf16 %v1119, %v1117
      %v1159 = vpack.c.bf16 %v1122, %v1120
      %v1160 = vpack.c.bf16 %v1123, %v1121
      %v1161 = vpack.c.bf16 %v1126, %v1124
      %v1162 = vpack.c.bf16 %v1127, %v1125
      %v1163 = vpack.c.bf16 %v1130, %v1128
      %v1164 = vpack.c.bf16 %v1131, %v1129
      %v1166 = vunpack.c.l.b16 %v1132
      %v1167 = vunpack.c.h.b16 %v1132
      %v1168 = vpack.c.b16 %v1166, %v1166
      %v1169 = vpack.c.b16 %v1167, %v1167
      %1172 = vmatprep.subr.bf16.mxu0 %v1134
      %1173 = vmatpush1.bf16.msra.mxu0 %v1133
      %1174 = vmatprep.subr.bf16.mxu0 %v1136
      %1175 = vmatpush1.bf16.msra.mxu0 %v1135
      %1176 = vmatprep.subr.bf16.mxu0 %v1138
      %1177 = vmatpush1.bf16.msra.mxu0 %v1137
      %1178 = vmatprep.subr.bf16.mxu0 %v1140
      %1179 = vmatpush1.bf16.msra.mxu0 %v1139
      %1180 = vmatprep.subr.bf16.mxu0 %v1142
      %1181 = vmatpush1.bf16.msra.mxu0 %v1141
      %1182 = vmatprep.subr.bf16.mxu0 %v1144
      %1183 = vmatpush1.bf16.msra.mxu0 %v1143
      %1184 = vmatprep.subr.bf16.mxu0 %v1146
      %1185 = vmatpush1.bf16.msra.mxu0 %v1145
      %1186 = vmatprep.subr.bf16.mxu0 %v1148
      %1187 = vmatpush1.bf16.msra.mxu0 %v1147
      %1188 = vmatprep.subr.bf16.mxu0 %v1150
      %1189 = vmatpush1.bf16.msra.mxu0 %v1149
      %1190 = vmatprep.subr.bf16.mxu0 %v1152
      %1191 = vmatpush1.bf16.msra.mxu0 %v1151
      %1192 = vmatprep.subr.bf16.mxu0 %v1154
      %1193 = vmatpush1.bf16.msra.mxu0 %v1153
      %1194 = vmatprep.subr.bf16.mxu0 %v1156
      %1195 = vmatpush1.bf16.msra.mxu0 %v1155
      %1196 = vmatprep.subr.bf16.mxu0 %v1158
      %1197 = vmatpush1.bf16.msra.mxu0 %v1157
      %1198 = vmatprep.subr.bf16.mxu0 %v1160
      %1199 = vmatpush1.bf16.msra.mxu0 %v1159
      %1200 = vmatprep.subr.bf16.mxu0 %v1162
      %1201 = vmatpush1.bf16.msra.mxu0 %v1161
      %1202 = vmatprep.subr.bf16.mxu0 %v1164
      %1203 = vmatpush1.bf16.msra.mxu0 %v1163
      %1204 = vmatprep.mubr.bf16.mxu0 %v1169
      %1205 = vmatmul.mubr.bf16.gmra.mrb[0].mxu0 %v1168
      %v1206 = vpop.f32.mrb[0].mxu0
      %v1207 = vadd.f32 0.0, %v1206
      %v1208 = vpop.f32.mrb[0].mxu0
      %v1209 = vadd.f32 0.0, %v1208
      %v1210 = vpop.f32.mrb[0].mxu0
      %v1211 = vpop.f32.mrb[0].mxu0
      %1212 = vdwg.mxu0
      %v1213 = vmul.f32 %v1207, 2.0
      %v1214 = vmul.f32 %v1209, 2.0
      %v1215 = vsub.f32 %v1213, 1.0
      %v1216 = vsub.f32 %v1214, 1.0
      %v1217 = vpack.c.bf16 %v1215, %v1215
      %v1218 = vpack.c.bf16 %v1216, %v1216
      %v1221 = vunpack.c.l.b16 %v1217
      %v1222 = vunpack.c.l.b16 %v1218
      %v1223 = vpack.c.b16 %v1222, %v1221
      %1225 = vst [vmem:[%s237] sm:$0x77] %v1223
      %s1226 = smul.u32 2, %s26
      %p1227 = scmp.lt.s32.totalorder %s25, 1
      %s1228 = scalar_select %p1227, %s25, 1
      %p1229 = scmp.lt.s32.totalorder %s1226, 1
      %s1230 = scalar_select %p1229, %s1226, 1
      %s1231 = smul.addr %s1228, 2
      %s1232 = sadd.s32 %s1230, %s1231
      %s1233 = smul.addr %s1232, 4
      %s1234 = scalar_lea.vmem %s4, %s1233
      // Predicated region
      $region33: #{tpu_custom_call.1} parent=31 // pred_check
        %p1235 = pneg %p131
      $region34: #{tpu_custom_call.1} parent=31 // pred_check_branch
        %1237 = sbr.rel (%p1235) target = $region36
      $region35: #{tpu_custom_call.1} parent=31 // pred_region
        %s1238 = smul.u32 2, %s26
      $region36: #{tpu_custom_call.1} parent=31 // pred_fallthru
        _
    $region32: #{tpu_custom_call.1} parent=5 // pred_fallthru
      _
    %p1239 = scmp.le.s32.totalorder 2, %s16
    // Predicated region
    $region37: #{tpu_custom_call.1} parent=5 // pred_check
      %p1240 = pneg %p1239
    $region38: #{tpu_custom_call.1} parent=5 // pred_check_branch
      %1242 = sbr.rel (%p1240) target = $region40
    $region39: #{tpu_custom_call.1} parent=5 // pred_region
      %s1243 = ssub.s32 %s16, 2
      // Predicated region
      $region41: #{tpu_custom_call.1} parent=39 // pred_check
        %p1244 = pneg %p137
      $region42: #{tpu_custom_call.1} parent=39 // pred_check_branch
        %1246 = sbr.rel (%p1244) target = $region44
      $region43: #{tpu_custom_call.1} parent=39 // pred_region
        %s1247 = smul.u32 2, %s28
        %p1248 = scmp.lt.s32.totalorder %s27, 1
        %s1249 = scalar_select %p1248, %s27, 1
        %p1250 = scmp.lt.s32.totalorder %s1247, 1
        %s1251 = scalar_select %p1250, %s1247, 1
        %s1252 = smul.addr %s1249, 2
        %s1253 = sadd.s32 %s1251, %s1252
        %s1254 = smul.addr %s1253, 4
        %s1255 = scalar_lea.vmem %s4, %s1254
      $region44: #{tpu_custom_call.1} parent=39 // pred_fallthru
        _
    $region40: #{tpu_custom_call.1} parent=5 // pred_fallthru
      _
  $region6: #{tpu_custom_call.1} parent=0 // loop_footer
    %s20 = sadd.s32 1, %s16
  $region7: #{tpu_custom_call.1} parent=0 // loop_footer_branch
    %15 = sbr.rel target = $region3
  $region8: #{tpu_custom_call.1} parent=0 // loop_exit
    _

</llo_original>
